<compile_context>
chip_gen: v6e
topology: v6e:2x2x1
jax: 0.10.0
libtpu: 0.0.40
codegen_flags: <defaults>
</compile_context>

<pallas_src>
import jax
import jax.numpy as jnp
from jax.experimental import pallas as pl
from jax.experimental.pallas import tpu as pltpu


def _round_up(n, m):
    return ((n + m - 1) // m) * m


def _noisy_gru_kernel(gi_ref, noise_ref, h0_ref, w_hh_ref, b_hh_n_ref,
                      hseq_ref, h_ref):
    """One grid step = Tc RNN timesteps. h_ref (final-hidden output) is the carry."""
    tc, bp, _ = gi_ref.shape
    lp = w_hh_ref.shape[0]                 # padded latent size (multiple of 128)

    @pl.when(pl.program_id(0) == 0)
    def _():
        h_ref[...] = h0_ref[...]

    # Hoist the n-gate hidden-bias broadcast out of the step loop (JAX does not
    # CSE per-iteration broadcast_in_dim).
    b_n = jnp.broadcast_to(b_hh_n_ref[...], (bp, lp))

    def step(s, h):
        gi = gi_ref[s]                                   # (Bp, 3*Lp), biases pre-folded
        # Only serial matmul left on the critical path: h @ W_hh (resident RHS).
        gh = jnp.dot(h, w_hh_ref[...], preferred_element_type=jnp.float32)
        r = jax.nn.sigmoid(gi[:, :lp] + gh[:, :lp])
        z = jax.nn.sigmoid(gi[:, lp:2 * lp] + gh[:, lp:2 * lp])
        n = jnp.tanh(gi[:, 2 * lp:] + r * (gh[:, 2 * lp:] + b_n))
        h_new = (1.0 - z) * n + z * h
        hseq_ref[s] = h_new                              # clean hidden (deferred readout)
        return h_new + noise_ref[s]                      # noisy hidden -> next carry

    h_ref[...] = jax.lax.fori_loop(0, tc, step, h_ref[...], unroll=True)


def noisy_gru_rollout(inputs_seq, hidden0, noise_seq, params, time_chunk=8):
    """Run T NoisyGRU_RNN.forward steps: hoisted gi GEMM -> fused recurrent
    Pallas kernel -> deferred readout GEMM.

    inputs_seq : (T, B, I)   noise_seq : (T, B, L)   hidden0 : (B, L)
    Returns (outputs (T, B, O), final_hidden (B, L)).
    """
    T, B, I = inputs_seq.shape
    L = hidden0.shape[1]
    O = params["b_out"].shape[-1]

    Bp = _round_up(B, 8)
    Lp = _round_up(L, 128)

    # Time-chunk size: largest value <= time_chunk that divides T (no time padding,
    # so the recurrence never sees fake steps).
    Tc = min(time_chunk, T)
    while T % Tc:
        Tc -= 1

    # --- pad weights; each of the 3 gate blocks is padded to Lp lanes ---------
    def pad_gate_cols(w):                               # (..., 3*L) -> (..., 3*Lp)
        lead = w.shape[:-1]
        w3 = w.reshape(*lead, 3, L)
        w3 = jnp.pad(w3, [(0, 0)] * len(lead) + [(0, 0), (0, Lp - L)])
        return w3.reshape(*lead, 3 * Lp)

    w_ih = pad_gate_cols(params["w_ih"])                                   # (I, 3*Lp)
    w_hh = pad_gate_cols(jnp.pad(params["w_hh"], ((0, Lp - L), (0, 0))))   # (Lp, 3*Lp)
    b_ih = pad_gate_cols(params["b_ih"])                                   # (1, 3*Lp)
    b_hh3 = params["b_hh"].reshape(1, 3, L)
    # r,z-gate hidden biases folded into gi; n-gate hidden bias stays in-kernel.
    b_hh_rz = pad_gate_cols(b_hh3.at[:, 2, :].set(0.0).reshape(1, 3 * L))  # (1, 3*Lp)
    b_hh_n = jnp.pad(b_hh3[:, 2, :], ((0, 0), (0, Lp - L)))                # (1, Lp)

    # --- pad activations (zero padding keeps padded hidden lanes exactly zero
    #     through the GRU recurrence) -------------------------------------------
    x = jnp.pad(inputs_seq, ((0, 0), (0, Bp - B), (0, 0)))                 # (T, Bp, I)
    h0 = jnp.pad(hidden0, ((0, Bp - B), (0, Lp - L)))
    noise = jnp.pad(noise_seq, ((0, 0), (0, Bp - B), (0, Lp - L)))

    # --- hoisted input projection: ONE big GEMM with M = T*Bp ------------------
    gi = (jnp.einsum("tbi,ig->tbg", x, w_ih,
                     preferred_element_type=jnp.float32)
          + b_ih + b_hh_rz)                                                # (T, Bp, 3*Lp)

    resident = lambda shape: pl.BlockSpec(shape, lambda c: (0, 0))

    hseq_pad, h_fin_pad = pl.pallas_call(
        _noisy_gru_kernel,
        out_shape=(
            jax.ShapeDtypeStruct((T, Bp, Lp), jnp.float32),   # clean hidden sequence
            jax.ShapeDtypeStruct((Bp, Lp), jnp.float32),      # final (noisy) hidden
        ),
        grid_spec=pltpu.PrefetchScalarGridSpec(
            num_scalar_prefetch=0,
            grid=(T // Tc,),
            in_specs=[
                pl.BlockSpec((Tc, Bp, 3 * Lp), lambda c: (c, 0, 0)),   # gi    (streamed)
                pl.BlockSpec((Tc, Bp, Lp), lambda c: (c, 0, 0)),       # noise (streamed)
                resident((Bp, Lp)),                                    # h0
                resident((Lp, 3 * Lp)),                                # W_hh  (resident)
                resident((1, Lp)),                                     # b_hh (n gate)
            ],
            out_specs=(
                pl.BlockSpec((Tc, Bp, Lp), lambda c: (c, 0, 0)),       # clean hidden seq
                resident((Bp, Lp)),                                    # carry / final h
            ),
        ),
        compiler_params=pltpu.CompilerParams(
            dimension_semantics=("arbitrary",),                        # serial recurrence
        ),
    )(gi, noise, h0, w_hh, b_hh_n)

    # --- deferred readout: ONE big GEMM on the clean hidden sequence -----------
    h_clean = hseq_pad[:, :B, :L]
    outputs = (jnp.einsum("tbl,lo->tbo", h_clean, params["w_out"],
                          preferred_element_type=jnp.float32)
               + params["b_out"])
    return outputs, h_fin_pad[:B, :L]


# ------------------------------ reference ------------------------------------

def _gru_cell_ref(x, h, params):
    L = h.shape[1]
    gi = x @ params["w_ih"] + params["b_ih"]
    gh = h @ params["w_hh"] + params["b_hh"]
    r = jax.nn.sigmoid(gi[:, :L] + gh[:, :L])
    z = jax.nn.sigmoid(gi[:, L:2 * L] + gh[:, L:2 * L])
    n = jnp.tanh(gi[:, 2 * L:] + r * gh[:, 2 * L:])
    return (1.0 - z) * n + z * h


def reference_rollout(inputs_seq, hidden0, noise_seq, params):
    """Pure-JAX re-statement of NoisyGRU_RNN.forward applied T times."""
    outs = []
    h = hidden0
    for t in range(inputs_seq.shape[0]):
        h_new = _gru_cell_ref(inputs_seq[t], h, params)
        outs.append(h_new @ params["w_out"] + params["b_out"])
        h = h_new + noise_seq[t]
    return jnp.stack(outs), h


def init_params(key, input_size, latent_size, output_size):
    """Synthetic parameters, PyTorch-style shapes stored pre-transposed.

    w_ih: (I, 3L)  w_hh: (L, 3L)  b_ih/b_hh: (1, 3L)  (gate order r, z, n)
    w_out: (L, O)  b_out: (1, O)
    """
    ks = jax.random.split(key, 6)
    s = 1.0 / jnp.sqrt(latent_size)
    u = lambda k, shape: jax.random.uniform(k, shape, jnp.float32, -s, s)
    return dict(
        w_ih=u(ks[0], (input_size, 3 * latent_size)),
        w_hh=u(ks[1], (latent_size, 3 * latent_size)),
        b_ih=u(ks[2], (1, 3 * latent_size)),
        b_hh=u(ks[3], (1, 3 * latent_size)),
        w_out=u(ks[4], (latent_size, output_size)),
        b_out=u(ks[5], (1, output_size)),
    )


if __name__ == "__main__":
    B, I, L, O, T = 4, 16, 32, 8, 16
    noise_level = 0.05
    latent_ic_var = 0.05

    key = jax.random.PRNGKey(0)
    k_in, k_h, k_noise, k_par = jax.random.split(key, 4)

    inputs_seq = jax.random.normal(k_in, (T, B, I), jnp.float32)
    # init_hidden(): latent_ics (zeros) + randn * latent_ic_var
    latent_ics = jnp.zeros((L,), jnp.float32)
    hidden0 = latent_ics[None, :] + jax.random.normal(k_h, (B, L), jnp.float32) * latent_ic_var
    # torch.randn_like(hidden) * noise_level for every step (drawn up front here)
    noise_seq = jax.random.normal(k_noise, (T, B, L), jnp.float32) * noise_level

    params = init_params(k_par, I, L, O)

    out, h_fin = jax.jit(noisy_gru_rollout)(inputs_seq, hidden0, noise_seq, params)
    jax.block_until_ready((out, h_fin))

    ref_out, ref_h = reference_rollout(inputs_seq, hidden0, noise_seq, params)
    assert jnp.allclose(out, ref_out, atol=1e-3, rtol=1e-3), "output mismatch"
    assert jnp.allclose(h_fin, ref_h, atol=1e-3, rtol=1e-3), "hidden mismatch"

    print("KERNEL_OK")
</pallas_src>

<mosaic_0001>
module attributes {stable_mosaic.version = 11 : i64} {
  func.func @_noisy_gru_kernel(%arg0: i32, %arg1: memref<8x8x384xf32, #tpu.memory_space<vmem>>, %arg2: memref<8x8x128xf32, #tpu.memory_space<vmem>>, %arg3: memref<8x128xf32, #tpu.memory_space<vmem>>, %arg4: memref<128x384xf32, #tpu.memory_space<vmem>>, %arg5: memref<1x128xf32, #tpu.memory_space<vmem>>, %arg6: memref<8x8x128xf32, #tpu.memory_space<vmem>>, %arg7: memref<8x128xf32, #tpu.memory_space<vmem>>) attributes {dimension_semantics = [#tpu.dimension_semantics<arbitrary>], iteration_bounds = array<i64: 2>, scalar_prefetch = 0 : i64, scratch_operands = 0 : i64, tpu.core_type = #tpu.core_type<tc>, window_params = [{transform_indices = @transform_0, window_bounds = array<i64: 8, 8, 384>}, {transform_indices = @transform_1, window_bounds = array<i64: 8, 8, 128>}, {pipeline_mode = #tpu.pipeline_mode<synchronous>, transform_indices = @transform_2, window_bounds = array<i64: 8, 128>}, {pipeline_mode = #tpu.pipeline_mode<synchronous>, transform_indices = @transform_3, window_bounds = array<i64: 128, 384>}, {pipeline_mode = #tpu.pipeline_mode<synchronous>, transform_indices = @transform_4, window_bounds = array<i64: 1, 128>}, {transform_indices = @transform_5, window_bounds = array<i64: 8, 8, 128>}, {pipeline_mode = #tpu.pipeline_mode<synchronous>, transform_indices = @transform_6, window_bounds = array<i64: 8, 128>}]} {
    %c0_i32 = arith.constant 0 : i32
    %0 = arith.cmpi eq, %arg0, %c0_i32 : i32
    %1 = arith.extui %0 : i1 to i32
    %c0_i32_0 = arith.constant 0 : i32
    %2 = arith.cmpi ne, %1, %c0_i32_0 : i32
    scf.if %2 {
      %c0_102 = arith.constant 0 : index
      %c0_103 = arith.constant 0 : index
      %328 = vector.load %arg3[%c0_102, %c0_103] : memref<8x128xf32, #tpu.memory_space<vmem>>, vector<8x128xf32>
      %c0_104 = arith.constant 0 : index
      %c0_105 = arith.constant 0 : index
      %329 = vector.load %arg7[%c0_104, %c0_105] : memref<8x128xf32, #tpu.memory_space<vmem>>, vector<8x128xf32>
      tpu.vector_store %arg7[%c0_104, %c0_105], %328 {strides = array<i32>} : memref<8x128xf32, #tpu.memory_space<vmem>>, vector<8x128xf32>,
    } else {
    }
    %c0 = arith.constant 0 : index
    %c0_1 = arith.constant 0 : index
    %3 = vector.load %arg5[%c0, %c0_1] : memref<1x128xf32, #tpu.memory_space<vmem>>, vector<1x128xf32>
    %4 = vector.shape_cast %3 : vector<1x128xf32> to vector<1x128xf32>
    %5 = vector.broadcast %4 : vector<1x128xf32> to vector<8x128xf32>
    %c0_2 = arith.constant 0 : index
    %c0_3 = arith.constant 0 : index
    %6 = vector.load %arg7[%c0_2, %c0_3] : memref<8x128xf32, #tpu.memory_space<vmem>>, vector<8x128xf32>
    %c0_i32_4 = arith.constant 0 : i32
    %7 = arith.index_cast %c0_i32_4 : i32 to index
    %c0_5 = arith.constant 0 : index
    %c0_6 = arith.constant 0 : index
    %8 = vector.load %arg1[%7, %c0_5, %c0_6] : memref<8x8x384xf32, #tpu.memory_space<vmem>>, vector<1x8x384xf32>
    %9 = vector.shape_cast %8 : vector<1x8x384xf32> to vector<8x384xf32>
    %c0_7 = arith.constant 0 : index
    %c0_8 = arith.constant 0 : index
    %10 = vector.load %arg4[%c0_7, %c0_8] : memref<128x384xf32, #tpu.memory_space<vmem>>, vector<128x384xf32>
    %cst = arith.constant dense<0.000000e+00> : vector<8x384xf32>
    %11 = tpu.matmul %6, %10, %cst {dimension_numbers = #tpu.dot_dimension_numbers<[1], [0], [0], [1], [0, 0, 1, 1], [], []>} : vector<8x128xf32>, vector<128x384xf32>, vector<8x384xf32> -> vector<8x384xf32>
    %12 = vector.extract_strided_slice %9 {offsets = [0, 0], sizes = [8, 128], strides = [1, 1]} : vector<8x384xf32> to vector<8x128xf32>
    %13 = vector.extract_strided_slice %11 {offsets = [0, 0], sizes = [8, 128], strides = [1, 1]} : vector<8x384xf32> to vector<8x128xf32>
    %14 = arith.addf %12, %13 : vector<8x128xf32>
    %15 = arith.negf %14 : vector<8x128xf32>
    %16 = math.exp %15 : vector<8x128xf32>
    %cst_9 = arith.constant 1.000000e+00 : f32
    %17 = vector.broadcast %cst_9 : f32 to vector<8x128xf32>
    %18 = arith.addf %17, %16 : vector<8x128xf32>
    %19 = arith.divf %17, %18 : vector<8x128xf32>
    %20 = vector.extract_strided_slice %9 {offsets = [0, 128], sizes = [8, 128], strides = [1, 1]} : vector<8x384xf32> to vector<8x128xf32>
    %21 = vector.extract_strided_slice %11 {offsets = [0, 128], sizes = [8, 128], strides = [1, 1]} : vector<8x384xf32> to vector<8x128xf32>
    %22 = arith.addf %20, %21 : vector<8x128xf32>
    %23 = arith.negf %22 : vector<8x128xf32>
    %24 = math.exp %23 : vector<8x128xf32>
    %cst_10 = arith.constant 1.000000e+00 : f32
    %25 = vector.broadcast %cst_10 : f32 to vector<8x128xf32>
    %26 = arith.addf %25, %24 : vector<8x128xf32>
    %27 = arith.divf %25, %26 : vector<8x128xf32>
    %28 = vector.extract_strided_slice %9 {offsets = [0, 256], sizes = [8, 128], strides = [1, 1]} : vector<8x384xf32> to vector<8x128xf32>
    %29 = vector.extract_strided_slice %11 {offsets = [0, 256], sizes = [8, 128], strides = [1, 1]} : vector<8x384xf32> to vector<8x128xf32>
    %30 = arith.addf %29, %5 : vector<8x128xf32>
    %31 = arith.mulf %19, %30 : vector<8x128xf32>
    %32 = arith.addf %28, %31 : vector<8x128xf32>
    %33 = math.tanh %32 : vector<8x128xf32>
    %cst_11 = arith.constant 1.000000e+00 : f32
    %34 = vector.broadcast %cst_11 : f32 to vector<8x128xf32>
    %35 = arith.subf %34, %27 : vector<8x128xf32>
    %36 = arith.mulf %35, %33 : vector<8x128xf32>
    %37 = arith.mulf %27, %6 : vector<8x128xf32>
    %38 = arith.addf %36, %37 : vector<8x128xf32>
    %39 = arith.index_cast %c0_i32_4 : i32 to index
    %c0_12 = arith.constant 0 : index
    %c0_13 = arith.constant 0 : index
    %40 = vector.load %arg6[%39, %c0_12, %c0_13] : memref<8x8x128xf32, #tpu.memory_space<vmem>>, vector<1x8x128xf32>
    %41 = vector.shape_cast %40 : vector<1x8x128xf32> to vector<8x128xf32>
    %42 = vector.shape_cast %38 : vector<8x128xf32> to vector<1x8x128xf32>
    tpu.vector_store %arg6[%39, %c0_12, %c0_13], %42 {strides = array<i32>} : memref<8x8x128xf32, #tpu.memory_space<vmem>>, vector<1x8x128xf32>,
    %43 = arith.index_cast %c0_i32_4 : i32 to index
    %c0_14 = arith.constant 0 : index
    %c0_15 = arith.constant 0 : index
    %44 = vector.load %arg2[%43, %c0_14, %c0_15] : memref<8x8x128xf32, #tpu.memory_space<vmem>>, vector<1x8x128xf32>
    %45 = vector.shape_cast %44 : vector<1x8x128xf32> to vector<8x128xf32>
    %46 = arith.addf %38, %45 : vector<8x128xf32>
    %c1_i32 = arith.constant 1 : i32
    %47 = arith.index_cast %c1_i32 : i32 to index
    %c0_16 = arith.constant 0 : index
    %c0_17 = arith.constant 0 : index
    %48 = vector.load %arg1[%47, %c0_16, %c0_17] : memref<8x8x384xf32, #tpu.memory_space<vmem>>, vector<1x8x384xf32>
    %49 = vector.shape_cast %48 : vector<1x8x384xf32> to vector<8x384xf32>
    %c0_18 = arith.constant 0 : index
    %c0_19 = arith.constant 0 : index
    %50 = vector.load %arg4[%c0_18, %c0_19] : memref<128x384xf32, #tpu.memory_space<vmem>>, vector<128x384xf32>
    %cst_20 = arith.constant dense<0.000000e+00> : vector<8x384xf32>
    %51 = tpu.matmul %46, %50, %cst_20 {dimension_numbers = #tpu.dot_dimension_numbers<[1], [0], [0], [1], [0, 0, 1, 1], [], []>} : vector<8x128xf32>, vector<128x384xf32>, vector<8x384xf32> -> vector<8x384xf32>
    %52 = vector.extract_strided_slice %49 {offsets = [0, 0], sizes = [8, 128], strides = [1, 1]} : vector<8x384xf32> to vector<8x128xf32>
    %53 = vector.extract_strided_slice %51 {offsets = [0, 0], sizes = [8, 128], strides = [1, 1]} : vector<8x384xf32> to vector<8x128xf32>
    %54 = arith.addf %52, %53 : vector<8x128xf32>
    %55 = arith.negf %54 : vector<8x128xf32>
    %56 = math.exp %55 : vector<8x128xf32>
    %cst_21 = arith.constant 1.000000e+00 : f32
    %57 = vector.broadcast %cst_21 : f32 to vector<8x128xf32>
    %58 = arith.addf %57, %56 : vector<8x128xf32>
    %59 = arith.divf %57, %58 : vector<8x128xf32>
    %60 = vector.extract_strided_slice %49 {offsets = [0, 128], sizes = [8, 128], strides = [1, 1]} : vector<8x384xf32> to vector<8x128xf32>
    %61 = vector.extract_strided_slice %51 {offsets = [0, 128], sizes = [8, 128], strides = [1, 1]} : vector<8x384xf32> to vector<8x128xf32>
    %62 = arith.addf %60, %61 : vector<8x128xf32>
    %63 = arith.negf %62 : vector<8x128xf32>
    %64 = math.exp %63 : vector<8x128xf32>
    %cst_22 = arith.constant 1.000000e+00 : f32
    %65 = vector.broadcast %cst_22 : f32 to vector<8x128xf32>
    %66 = arith.addf %65, %64 : vector<8x128xf32>
    %67 = arith.divf %65, %66 : vector<8x128xf32>
    %68 = vector.extract_strided_slice %49 {offsets = [0, 256], sizes = [8, 128], strides = [1, 1]} : vector<8x384xf32> to vector<8x128xf32>
    %69 = vector.extract_strided_slice %51 {offsets = [0, 256], sizes = [8, 128], strides = [1, 1]} : vector<8x384xf32> to vector<8x128xf32>
    %70 = arith.addf %69, %5 : vector<8x128xf32>
    %71 = arith.mulf %59, %70 : vector<8x128xf32>
    %72 = arith.addf %68, %71 : vector<8x128xf32>
    %73 = math.tanh %72 : vector<8x128xf32>
    %cst_23 = arith.constant 1.000000e+00 : f32
    %74 = vector.broadcast %cst_23 : f32 to vector<8x128xf32>
    %75 = arith.subf %74, %67 : vector<8x128xf32>
    %76 = arith.mulf %75, %73 : vector<8x128xf32>
    %77 = arith.mulf %67, %46 : vector<8x128xf32>
    %78 = arith.addf %76, %77 : vector<8x128xf32>
    %79 = arith.index_cast %c1_i32 : i32 to index
    %c0_24 = arith.constant 0 : index
    %c0_25 = arith.constant 0 : index
    %80 = vector.load %arg6[%79, %c0_24, %c0_25] : memref<8x8x128xf32, #tpu.memory_space<vmem>>, vector<1x8x128xf32>
    %81 = vector.shape_cast %80 : vector<1x8x128xf32> to vector<8x128xf32>
    %82 = vector.shape_cast %78 : vector<8x128xf32> to vector<1x8x128xf32>
    tpu.vector_store %arg6[%79, %c0_24, %c0_25], %82 {strides = array<i32>} : memref<8x8x128xf32, #tpu.memory_space<vmem>>, vector<1x8x128xf32>,
    %83 = arith.index_cast %c1_i32 : i32 to index
    %c0_26 = arith.constant 0 : index
    %c0_27 = arith.constant 0 : index
    %84 = vector.load %arg2[%83, %c0_26, %c0_27] : memref<8x8x128xf32, #tpu.memory_space<vmem>>, vector<1x8x128xf32>
    %85 = vector.shape_cast %84 : vector<1x8x128xf32> to vector<8x128xf32>
    %86 = arith.addf %78, %85 : vector<8x128xf32>
    %c2_i32 = arith.constant 2 : i32
    %87 = arith.index_cast %c2_i32 : i32 to index
    %c0_28 = arith.constant 0 : index
    %c0_29 = arith.constant 0 : index
    %88 = vector.load %arg1[%87, %c0_28, %c0_29] : memref<8x8x384xf32, #tpu.memory_space<vmem>>, vector<1x8x384xf32>
    %89 = vector.shape_cast %88 : vector<1x8x384xf32> to vector<8x384xf32>
    %c0_30 = arith.constant 0 : index
    %c0_31 = arith.constant 0 : index
    %90 = vector.load %arg4[%c0_30, %c0_31] : memref<128x384xf32, #tpu.memory_space<vmem>>, vector<128x384xf32>
    %cst_32 = arith.constant dense<0.000000e+00> : vector<8x384xf32>
    %91 = tpu.matmul %86, %90, %cst_32 {dimension_numbers = #tpu.dot_dimension_numbers<[1], [0], [0], [1], [0, 0, 1, 1], [], []>} : vector<8x128xf32>, vector<128x384xf32>, vector<8x384xf32> -> vector<8x384xf32>
    %92 = vector.extract_strided_slice %89 {offsets = [0, 0], sizes = [8, 128], strides = [1, 1]} : vector<8x384xf32> to vector<8x128xf32>
    %93 = vector.extract_strided_slice %91 {offsets = [0, 0], sizes = [8, 128], strides = [1, 1]} : vector<8x384xf32> to vector<8x128xf32>
    %94 = arith.addf %92, %93 : vector<8x128xf32>
    %95 = arith.negf %94 : vector<8x128xf32>
    %96 = math.exp %95 : vector<8x128xf32>
    %cst_33 = arith.constant 1.000000e+00 : f32
    %97 = vector.broadcast %cst_33 : f32 to vector<8x128xf32>
    %98 = arith.addf %97, %96 : vector<8x128xf32>
    %99 = arith.divf %97, %98 : vector<8x128xf32>
    %100 = vector.extract_strided_slice %89 {offsets = [0, 128], sizes = [8, 128], strides = [1, 1]} : vector<8x384xf32> to vector<8x128xf32>
    %101 = vector.extract_strided_slice %91 {offsets = [0, 128], sizes = [8, 128], strides = [1, 1]} : vector<8x384xf32> to vector<8x128xf32>
    %102 = arith.addf %100, %101 : vector<8x128xf32>
    %103 = arith.negf %102 : vector<8x128xf32>
    %104 = math.exp %103 : vector<8x128xf32>
    %cst_34 = arith.constant 1.000000e+00 : f32
    %105 = vector.broadcast %cst_34 : f32 to vector<8x128xf32>
    %106 = arith.addf %105, %104 : vector<8x128xf32>
    %107 = arith.divf %105, %106 : vector<8x128xf32>
    %108 = vector.extract_strided_slice %89 {offsets = [0, 256], sizes = [8, 128], strides = [1, 1]} : vector<8x384xf32> to vector<8x128xf32>
    %109 = vector.extract_strided_slice %91 {offsets = [0, 256], sizes = [8, 128], strides = [1, 1]} : vector<8x384xf32> to vector<8x128xf32>
    %110 = arith.addf %109, %5 : vector<8x128xf32>
    %111 = arith.mulf %99, %110 : vector<8x128xf32>
    %112 = arith.addf %108, %111 : vector<8x128xf32>
    %113 = math.tanh %112 : vector<8x128xf32>
    %cst_35 = arith.constant 1.000000e+00 : f32
    %114 = vector.broadcast %cst_35 : f32 to vector<8x128xf32>
    %115 = arith.subf %114, %107 : vector<8x128xf32>
    %116 = arith.mulf %115, %113 : vector<8x128xf32>
    %117 = arith.mulf %107, %86 : vector<8x128xf32>
    %118 = arith.addf %116, %117 : vector<8x128xf32>
    %119 = arith.index_cast %c2_i32 : i32 to index
    %c0_36 = arith.constant 0 : index
    %c0_37 = arith.constant 0 : index
    %120 = vector.load %arg6[%119, %c0_36, %c0_37] : memref<8x8x128xf32, #tpu.memory_space<vmem>>, vector<1x8x128xf32>
    %121 = vector.shape_cast %120 : vector<1x8x128xf32> to vector<8x128xf32>
    %122 = vector.shape_cast %118 : vector<8x128xf32> to vector<1x8x128xf32>
    tpu.vector_store %arg6[%119, %c0_36, %c0_37], %122 {strides = array<i32>} : memref<8x8x128xf32, #tpu.memory_space<vmem>>, vector<1x8x128xf32>,
    %123 = arith.index_cast %c2_i32 : i32 to index
    %c0_38 = arith.constant 0 : index
    %c0_39 = arith.constant 0 : index
    %124 = vector.load %arg2[%123, %c0_38, %c0_39] : memref<8x8x128xf32, #tpu.memory_space<vmem>>, vector<1x8x128xf32>
    %125 = vector.shape_cast %124 : vector<1x8x128xf32> to vector<8x128xf32>
    %126 = arith.addf %118, %125 : vector<8x128xf32>
    %c3_i32 = arith.constant 3 : i32
    %127 = arith.index_cast %c3_i32 : i32 to index
    %c0_40 = arith.constant 0 : index
    %c0_41 = arith.constant 0 : index
    %128 = vector.load %arg1[%127, %c0_40, %c0_41] : memref<8x8x384xf32, #tpu.memory_space<vmem>>, vector<1x8x384xf32>
    %129 = vector.shape_cast %128 : vector<1x8x384xf32> to vector<8x384xf32>
    %c0_42 = arith.constant 0 : index
    %c0_43 = arith.constant 0 : index
    %130 = vector.load %arg4[%c0_42, %c0_43] : memref<128x384xf32, #tpu.memory_space<vmem>>, vector<128x384xf32>
    %cst_44 = arith.constant dense<0.000000e+00> : vector<8x384xf32>
    %131 = tpu.matmul %126, %130, %cst_44 {dimension_numbers = #tpu.dot_dimension_numbers<[1], [0], [0], [1], [0, 0, 1, 1], [], []>} : vector<8x128xf32>, vector<128x384xf32>, vector<8x384xf32> -> vector<8x384xf32>
    %132 = vector.extract_strided_slice %129 {offsets = [0, 0], sizes = [8, 128], strides = [1, 1]} : vector<8x384xf32> to vector<8x128xf32>
    %133 = vector.extract_strided_slice %131 {offsets = [0, 0], sizes = [8, 128], strides = [1, 1]} : vector<8x384xf32> to vector<8x128xf32>
    %134 = arith.addf %132, %133 : vector<8x128xf32>
    %135 = arith.negf %134 : vector<8x128xf32>
    %136 = math.exp %135 : vector<8x128xf32>
    %cst_45 = arith.constant 1.000000e+00 : f32
    %137 = vector.broadcast %cst_45 : f32 to vector<8x128xf32>
    %138 = arith.addf %137, %136 : vector<8x128xf32>
    %139 = arith.divf %137, %138 : vector<8x128xf32>
    %140 = vector.extract_strided_slice %129 {offsets = [0, 128], sizes = [8, 128], strides = [1, 1]} : vector<8x384xf32> to vector<8x128xf32>
    %141 = vector.extract_strided_slice %131 {offsets = [0, 128], sizes = [8, 128], strides = [1, 1]} : vector<8x384xf32> to vector<8x128xf32>
    %142 = arith.addf %140, %141 : vector<8x128xf32>
    %143 = arith.negf %142 : vector<8x128xf32>
    %144 = math.exp %143 : vector<8x128xf32>
    %cst_46 = arith.constant 1.000000e+00 : f32
    %145 = vector.broadcast %cst_46 : f32 to vector<8x128xf32>
    %146 = arith.addf %145, %144 : vector<8x128xf32>
    %147 = arith.divf %145, %146 : vector<8x128xf32>
    %148 = vector.extract_strided_slice %129 {offsets = [0, 256], sizes = [8, 128], strides = [1, 1]} : vector<8x384xf32> to vector<8x128xf32>
    %149 = vector.extract_strided_slice %131 {offsets = [0, 256], sizes = [8, 128], strides = [1, 1]} : vector<8x384xf32> to vector<8x128xf32>
    %150 = arith.addf %149, %5 : vector<8x128xf32>
    %151 = arith.mulf %139, %150 : vector<8x128xf32>
    %152 = arith.addf %148, %151 : vector<8x128xf32>
    %153 = math.tanh %152 : vector<8x128xf32>
    %cst_47 = arith.constant 1.000000e+00 : f32
    %154 = vector.broadcast %cst_47 : f32 to vector<8x128xf32>
    %155 = arith.subf %154, %147 : vector<8x128xf32>
    %156 = arith.mulf %155, %153 : vector<8x128xf32>
    %157 = arith.mulf %147, %126 : vector<8x128xf32>
    %158 = arith.addf %156, %157 : vector<8x128xf32>
    %159 = arith.index_cast %c3_i32 : i32 to index
    %c0_48 = arith.constant 0 : index
    %c0_49 = arith.constant 0 : index
    %160 = vector.load %arg6[%159, %c0_48, %c0_49] : memref<8x8x128xf32, #tpu.memory_space<vmem>>, vector<1x8x128xf32>
    %161 = vector.shape_cast %160 : vector<1x8x128xf32> to vector<8x128xf32>
    %162 = vector.shape_cast %158 : vector<8x128xf32> to vector<1x8x128xf32>
    tpu.vector_store %arg6[%159, %c0_48, %c0_49], %162 {strides = array<i32>} : memref<8x8x128xf32, #tpu.memory_space<vmem>>, vector<1x8x128xf32>,
    %163 = arith.index_cast %c3_i32 : i32 to index
    %c0_50 = arith.constant 0 : index
    %c0_51 = arith.constant 0 : index
    %164 = vector.load %arg2[%163, %c0_50, %c0_51] : memref<8x8x128xf32, #tpu.memory_space<vmem>>, vector<1x8x128xf32>
    %165 = vector.shape_cast %164 : vector<1x8x128xf32> to vector<8x128xf32>
    %166 = arith.addf %158, %165 : vector<8x128xf32>
    %c4_i32 = arith.constant 4 : i32
    %167 = arith.index_cast %c4_i32 : i32 to index
    %c0_52 = arith.constant 0 : index
    %c0_53 = arith.constant 0 : index
    %168 = vector.load %arg1[%167, %c0_52, %c0_53] : memref<8x8x384xf32, #tpu.memory_space<vmem>>, vector<1x8x384xf32>
    %169 = vector.shape_cast %168 : vector<1x8x384xf32> to vector<8x384xf32>
    %c0_54 = arith.constant 0 : index
    %c0_55 = arith.constant 0 : index
    %170 = vector.load %arg4[%c0_54, %c0_55] : memref<128x384xf32, #tpu.memory_space<vmem>>, vector<128x384xf32>
    %cst_56 = arith.constant dense<0.000000e+00> : vector<8x384xf32>
    %171 = tpu.matmul %166, %170, %cst_56 {dimension_numbers = #tpu.dot_dimension_numbers<[1], [0], [0], [1], [0, 0, 1, 1], [], []>} : vector<8x128xf32>, vector<128x384xf32>, vector<8x384xf32> -> vector<8x384xf32>
    %172 = vector.extract_strided_slice %169 {offsets = [0, 0], sizes = [8, 128], strides = [1, 1]} : vector<8x384xf32> to vector<8x128xf32>
    %173 = vector.extract_strided_slice %171 {offsets = [0, 0], sizes = [8, 128], strides = [1, 1]} : vector<8x384xf32> to vector<8x128xf32>
    %174 = arith.addf %172, %173 : vector<8x128xf32>
    %175 = arith.negf %174 : vector<8x128xf32>
    %176 = math.exp %175 : vector<8x128xf32>
    %cst_57 = arith.constant 1.000000e+00 : f32
    %177 = vector.broadcast %cst_57 : f32 to vector<8x128xf32>
    %178 = arith.addf %177, %176 : vector<8x128xf32>
    %179 = arith.divf %177, %178 : vector<8x128xf32>
    %180 = vector.extract_strided_slice %169 {offsets = [0, 128], sizes = [8, 128], strides = [1, 1]} : vector<8x384xf32> to vector<8x128xf32>
    %181 = vector.extract_strided_slice %171 {offsets = [0, 128], sizes = [8, 128], strides = [1, 1]} : vector<8x384xf32> to vector<8x128xf32>
    %182 = arith.addf %180, %181 : vector<8x128xf32>
    %183 = arith.negf %182 : vector<8x128xf32>
    %184 = math.exp %183 : vector<8x128xf32>
    %cst_58 = arith.constant 1.000000e+00 : f32
    %185 = vector.broadcast %cst_58 : f32 to vector<8x128xf32>
    %186 = arith.addf %185, %184 : vector<8x128xf32>
    %187 = arith.divf %185, %186 : vector<8x128xf32>
    %188 = vector.extract_strided_slice %169 {offsets = [0, 256], sizes = [8, 128], strides = [1, 1]} : vector<8x384xf32> to vector<8x128xf32>
    %189 = vector.extract_strided_slice %171 {offsets = [0, 256], sizes = [8, 128], strides = [1, 1]} : vector<8x384xf32> to vector<8x128xf32>
    %190 = arith.addf %189, %5 : vector<8x128xf32>
    %191 = arith.mulf %179, %190 : vector<8x128xf32>
    %192 = arith.addf %188, %191 : vector<8x128xf32>
    %193 = math.tanh %192 : vector<8x128xf32>
    %cst_59 = arith.constant 1.000000e+00 : f32
    %194 = vector.broadcast %cst_59 : f32 to vector<8x128xf32>
    %195 = arith.subf %194, %187 : vector<8x128xf32>
    %196 = arith.mulf %195, %193 : vector<8x128xf32>
    %197 = arith.mulf %187, %166 : vector<8x128xf32>
    %198 = arith.addf %196, %197 : vector<8x128xf32>
    %199 = arith.index_cast %c4_i32 : i32 to index
    %c0_60 = arith.constant 0 : index
    %c0_61 = arith.constant 0 : index
    %200 = vector.load %arg6[%199, %c0_60, %c0_61] : memref<8x8x128xf32, #tpu.memory_space<vmem>>, vector<1x8x128xf32>
    %201 = vector.shape_cast %200 : vector<1x8x128xf32> to vector<8x128xf32>
    %202 = vector.shape_cast %198 : vector<8x128xf32> to vector<1x8x128xf32>
    tpu.vector_store %arg6[%199, %c0_60, %c0_61], %202 {strides = array<i32>} : memref<8x8x128xf32, #tpu.memory_space<vmem>>, vector<1x8x128xf32>,
    %203 = arith.index_cast %c4_i32 : i32 to index
    %c0_62 = arith.constant 0 : index
    %c0_63 = arith.constant 0 : index
    %204 = vector.load %arg2[%203, %c0_62, %c0_63] : memref<8x8x128xf32, #tpu.memory_space<vmem>>, vector<1x8x128xf32>
    %205 = vector.shape_cast %204 : vector<1x8x128xf32> to vector<8x128xf32>
    %206 = arith.addf %198, %205 : vector<8x128xf32>
    %c5_i32 = arith.constant 5 : i32
    %207 = arith.index_cast %c5_i32 : i32 to index
    %c0_64 = arith.constant 0 : index
    %c0_65 = arith.constant 0 : index
    %208 = vector.load %arg1[%207, %c0_64, %c0_65] : memref<8x8x384xf32, #tpu.memory_space<vmem>>, vector<1x8x384xf32>
    %209 = vector.shape_cast %208 : vector<1x8x384xf32> to vector<8x384xf32>
    %c0_66 = arith.constant 0 : index
    %c0_67 = arith.constant 0 : index
    %210 = vector.load %arg4[%c0_66, %c0_67] : memref<128x384xf32, #tpu.memory_space<vmem>>, vector<128x384xf32>
    %cst_68 = arith.constant dense<0.000000e+00> : vector<8x384xf32>
    %211 = tpu.matmul %206, %210, %cst_68 {dimension_numbers = #tpu.dot_dimension_numbers<[1], [0], [0], [1], [0, 0, 1, 1], [], []>} : vector<8x128xf32>, vector<128x384xf32>, vector<8x384xf32> -> vector<8x384xf32>
    %212 = vector.extract_strided_slice %209 {offsets = [0, 0], sizes = [8, 128], strides = [1, 1]} : vector<8x384xf32> to vector<8x128xf32>
    %213 = vector.extract_strided_slice %211 {offsets = [0, 0], sizes = [8, 128], strides = [1, 1]} : vector<8x384xf32> to vector<8x128xf32>
    %214 = arith.addf %212, %213 : vector<8x128xf32>
    %215 = arith.negf %214 : vector<8x128xf32>
    %216 = math.exp %215 : vector<8x128xf32>
    %cst_69 = arith.constant 1.000000e+00 : f32
    %217 = vector.broadcast %cst_69 : f32 to vector<8x128xf32>
    %218 = arith.addf %217, %216 : vector<8x128xf32>
    %219 = arith.divf %217, %218 : vector<8x128xf32>
    %220 = vector.extract_strided_slice %209 {offsets = [0, 128], sizes = [8, 128], strides = [1, 1]} : vector<8x384xf32> to vector<8x128xf32>
    %221 = vector.extract_strided_slice %211 {offsets = [0, 128], sizes = [8, 128], strides = [1, 1]} : vector<8x384xf32> to vector<8x128xf32>
    %222 = arith.addf %220, %221 : vector<8x128xf32>
    %223 = arith.negf %222 : vector<8x128xf32>
    %224 = math.exp %223 : vector<8x128xf32>
    %cst_70 = arith.constant 1.000000e+00 : f32
    %225 = vector.broadcast %cst_70 : f32 to vector<8x128xf32>
    %226 = arith.addf %225, %224 : vector<8x128xf32>
    %227 = arith.divf %225, %226 : vector<8x128xf32>
    %228 = vector.extract_strided_slice %209 {offsets = [0, 256], sizes = [8, 128], strides = [1, 1]} : vector<8x384xf32> to vector<8x128xf32>
    %229 = vector.extract_strided_slice %211 {offsets = [0, 256], sizes = [8, 128], strides = [1, 1]} : vector<8x384xf32> to vector<8x128xf32>
    %230 = arith.addf %229, %5 : vector<8x128xf32>
    %231 = arith.mulf %219, %230 : vector<8x128xf32>
    %232 = arith.addf %228, %231 : vector<8x128xf32>
    %233 = math.tanh %232 : vector<8x128xf32>
    %cst_71 = arith.constant 1.000000e+00 : f32
    %234 = vector.broadcast %cst_71 : f32 to vector<8x128xf32>
    %235 = arith.subf %234, %227 : vector<8x128xf32>
    %236 = arith.mulf %235, %233 : vector<8x128xf32>
    %237 = arith.mulf %227, %206 : vector<8x128xf32>
    %238 = arith.addf %236, %237 : vector<8x128xf32>
    %239 = arith.index_cast %c5_i32 : i32 to index
    %c0_72 = arith.constant 0 : index
    %c0_73 = arith.constant 0 : index
    %240 = vector.load %arg6[%239, %c0_72, %c0_73] : memref<8x8x128xf32, #tpu.memory_space<vmem>>, vector<1x8x128xf32>
    %241 = vector.shape_cast %240 : vector<1x8x128xf32> to vector<8x128xf32>
    %242 = vector.shape_cast %238 : vector<8x128xf32> to vector<1x8x128xf32>
    tpu.vector_store %arg6[%239, %c0_72, %c0_73], %242 {strides = array<i32>} : memref<8x8x128xf32, #tpu.memory_space<vmem>>, vector<1x8x128xf32>,
    %243 = arith.index_cast %c5_i32 : i32 to index
    %c0_74 = arith.constant 0 : index
    %c0_75 = arith.constant 0 : index
    %244 = vector.load %arg2[%243, %c0_74, %c0_75] : memref<8x8x128xf32, #tpu.memory_space<vmem>>, vector<1x8x128xf32>
    %245 = vector.shape_cast %244 : vector<1x8x128xf32> to vector<8x128xf32>
    %246 = arith.addf %238, %245 : vector<8x128xf32>
    %c6_i32 = arith.constant 6 : i32
    %247 = arith.index_cast %c6_i32 : i32 to index
    %c0_76 = arith.constant 0 : index
    %c0_77 = arith.constant 0 : index
    %248 = vector.load %arg1[%247, %c0_76, %c0_77] : memref<8x8x384xf32, #tpu.memory_space<vmem>>, vector<1x8x384xf32>
    %249 = vector.shape_cast %248 : vector<1x8x384xf32> to vector<8x384xf32>
    %c0_78 = arith.constant 0 : index
    %c0_79 = arith.constant 0 : index
    %250 = vector.load %arg4[%c0_78, %c0_79] : memref<128x384xf32, #tpu.memory_space<vmem>>, vector<128x384xf32>
    %cst_80 = arith.constant dense<0.000000e+00> : vector<8x384xf32>
    %251 = tpu.matmul %246, %250, %cst_80 {dimension_numbers = #tpu.dot_dimension_numbers<[1], [0], [0], [1], [0, 0, 1, 1], [], []>} : vector<8x128xf32>, vector<128x384xf32>, vector<8x384xf32> -> vector<8x384xf32>
    %252 = vector.extract_strided_slice %249 {offsets = [0, 0], sizes = [8, 128], strides = [1, 1]} : vector<8x384xf32> to vector<8x128xf32>
    %253 = vector.extract_strided_slice %251 {offsets = [0, 0], sizes = [8, 128], strides = [1, 1]} : vector<8x384xf32> to vector<8x128xf32>
    %254 = arith.addf %252, %253 : vector<8x128xf32>
    %255 = arith.negf %254 : vector<8x128xf32>
    %256 = math.exp %255 : vector<8x128xf32>
    %cst_81 = arith.constant 1.000000e+00 : f32
    %257 = vector.broadcast %cst_81 : f32 to vector<8x128xf32>
    %258 = arith.addf %257, %256 : vector<8x128xf32>
    %259 = arith.divf %257, %258 : vector<8x128xf32>
    %260 = vector.extract_strided_slice %249 {offsets = [0, 128], sizes = [8, 128], strides = [1, 1]} : vector<8x384xf32> to vector<8x128xf32>
    %261 = vector.extract_strided_slice %251 {offsets = [0, 128], sizes = [8, 128], strides = [1, 1]} : vector<8x384xf32> to vector<8x128xf32>
    %262 = arith.addf %260, %261 : vector<8x128xf32>
    %263 = arith.negf %262 : vector<8x128xf32>
    %264 = math.exp %263 : vector<8x128xf32>
    %cst_82 = arith.constant 1.000000e+00 : f32
    %265 = vector.broadcast %cst_82 : f32 to vector<8x128xf32>
    %266 = arith.addf %265, %264 : vector<8x128xf32>
    %267 = arith.divf %265, %266 : vector<8x128xf32>
    %268 = vector.extract_strided_slice %249 {offsets = [0, 256], sizes = [8, 128], strides = [1, 1]} : vector<8x384xf32> to vector<8x128xf32>
    %269 = vector.extract_strided_slice %251 {offsets = [0, 256], sizes = [8, 128], strides = [1, 1]} : vector<8x384xf32> to vector<8x128xf32>
    %270 = arith.addf %269, %5 : vector<8x128xf32>
    %271 = arith.mulf %259, %270 : vector<8x128xf32>
    %272 = arith.addf %268, %271 : vector<8x128xf32>
    %273 = math.tanh %272 : vector<8x128xf32>
    %cst_83 = arith.constant 1.000000e+00 : f32
    %274 = vector.broadcast %cst_83 : f32 to vector<8x128xf32>
    %275 = arith.subf %274, %267 : vector<8x128xf32>
    %276 = arith.mulf %275, %273 : vector<8x128xf32>
    %277 = arith.mulf %267, %246 : vector<8x128xf32>
    %278 = arith.addf %276, %277 : vector<8x128xf32>
    %279 = arith.index_cast %c6_i32 : i32 to index
    %c0_84 = arith.constant 0 : index
    %c0_85 = arith.constant 0 : index
    %280 = vector.load %arg6[%279, %c0_84, %c0_85] : memref<8x8x128xf32, #tpu.memory_space<vmem>>, vector<1x8x128xf32>
    %281 = vector.shape_cast %280 : vector<1x8x128xf32> to vector<8x128xf32>
    %282 = vector.shape_cast %278 : vector<8x128xf32> to vector<1x8x128xf32>
    tpu.vector_store %arg6[%279, %c0_84, %c0_85], %282 {strides = array<i32>} : memref<8x8x128xf32, #tpu.memory_space<vmem>>, vector<1x8x128xf32>,
    %283 = arith.index_cast %c6_i32 : i32 to index
    %c0_86 = arith.constant 0 : index
    %c0_87 = arith.constant 0 : index
    %284 = vector.load %arg2[%283, %c0_86, %c0_87] : memref<8x8x128xf32, #tpu.memory_space<vmem>>, vector<1x8x128xf32>
    %285 = vector.shape_cast %284 : vector<1x8x128xf32> to vector<8x128xf32>
    %286 = arith.addf %278, %285 : vector<8x128xf32>
    %c7_i32 = arith.constant 7 : i32
    %287 = arith.index_cast %c7_i32 : i32 to index
    %c0_88 = arith.constant 0 : index
    %c0_89 = arith.constant 0 : index
    %288 = vector.load %arg1[%287, %c0_88, %c0_89] : memref<8x8x384xf32, #tpu.memory_space<vmem>>, vector<1x8x384xf32>
    %289 = vector.shape_cast %288 : vector<1x8x384xf32> to vector<8x384xf32>
    %c0_90 = arith.constant 0 : index
    %c0_91 = arith.constant 0 : index
    %290 = vector.load %arg4[%c0_90, %c0_91] : memref<128x384xf32, #tpu.memory_space<vmem>>, vector<128x384xf32>
    %cst_92 = arith.constant dense<0.000000e+00> : vector<8x384xf32>
    %291 = tpu.matmul %286, %290, %cst_92 {dimension_numbers = #tpu.dot_dimension_numbers<[1], [0], [0], [1], [0, 0, 1, 1], [], []>} : vector<8x128xf32>, vector<128x384xf32>, vector<8x384xf32> -> vector<8x384xf32>
    %292 = vector.extract_strided_slice %289 {offsets = [0, 0], sizes = [8, 128], strides = [1, 1]} : vector<8x384xf32> to vector<8x128xf32>
    %293 = vector.extract_strided_slice %291 {offsets = [0, 0], sizes = [8, 128], strides = [1, 1]} : vector<8x384xf32> to vector<8x128xf32>
    %294 = arith.addf %292, %293 : vector<8x128xf32>
    %295 = arith.negf %294 : vector<8x128xf32>
    %296 = math.exp %295 : vector<8x128xf32>
    %cst_93 = arith.constant 1.000000e+00 : f32
    %297 = vector.broadcast %cst_93 : f32 to vector<8x128xf32>
    %298 = arith.addf %297, %296 : vector<8x128xf32>
    %299 = arith.divf %297, %298 : vector<8x128xf32>
    %300 = vector.extract_strided_slice %289 {offsets = [0, 128], sizes = [8, 128], strides = [1, 1]} : vector<8x384xf32> to vector<8x128xf32>
    %301 = vector.extract_strided_slice %291 {offsets = [0, 128], sizes = [8, 128], strides = [1, 1]} : vector<8x384xf32> to vector<8x128xf32>
    %302 = arith.addf %300, %301 : vector<8x128xf32>
    %303 = arith.negf %302 : vector<8x128xf32>
    %304 = math.exp %303 : vector<8x128xf32>
    %cst_94 = arith.constant 1.000000e+00 : f32
    %305 = vector.broadcast %cst_94 : f32 to vector<8x128xf32>
    %306 = arith.addf %305, %304 : vector<8x128xf32>
    %307 = arith.divf %305, %306 : vector<8x128xf32>
    %308 = vector.extract_strided_slice %289 {offsets = [0, 256], sizes = [8, 128], strides = [1, 1]} : vector<8x384xf32> to vector<8x128xf32>
    %309 = vector.extract_strided_slice %291 {offsets = [0, 256], sizes = [8, 128], strides = [1, 1]} : vector<8x384xf32> to vector<8x128xf32>
    %310 = arith.addf %309, %5 : vector<8x128xf32>
    %311 = arith.mulf %299, %310 : vector<8x128xf32>
    %312 = arith.addf %308, %311 : vector<8x128xf32>
    %313 = math.tanh %312 : vector<8x128xf32>
    %cst_95 = arith.constant 1.000000e+00 : f32
    %314 = vector.broadcast %cst_95 : f32 to vector<8x128xf32>
    %315 = arith.subf %314, %307 : vector<8x128xf32>
    %316 = arith.mulf %315, %313 : vector<8x128xf32>
    %317 = arith.mulf %307, %286 : vector<8x128xf32>
    %318 = arith.addf %316, %317 : vector<8x128xf32>
    %319 = arith.index_cast %c7_i32 : i32 to index
    %c0_96 = arith.constant 0 : index
    %c0_97 = arith.constant 0 : index
    %320 = vector.load %arg6[%319, %c0_96, %c0_97] : memref<8x8x128xf32, #tpu.memory_space<vmem>>, vector<1x8x128xf32>
    %321 = vector.shape_cast %320 : vector<1x8x128xf32> to vector<8x128xf32>
    %322 = vector.shape_cast %318 : vector<8x128xf32> to vector<1x8x128xf32>
    tpu.vector_store %arg6[%319, %c0_96, %c0_97], %322 {strides = array<i32>} : memref<8x8x128xf32, #tpu.memory_space<vmem>>, vector<1x8x128xf32>,
    %323 = arith.index_cast %c7_i32 : i32 to index
    %c0_98 = arith.constant 0 : index
    %c0_99 = arith.constant 0 : index
    %324 = vector.load %arg2[%323, %c0_98, %c0_99] : memref<8x8x128xf32, #tpu.memory_space<vmem>>, vector<1x8x128xf32>
    %325 = vector.shape_cast %324 : vector<1x8x128xf32> to vector<8x128xf32>
    %326 = arith.addf %318, %325 : vector<8x128xf32>
    %c8_i32 = arith.constant 8 : i32
    %c0_100 = arith.constant 0 : index
    %c0_101 = arith.constant 0 : index
    %327 = vector.load %arg7[%c0_100, %c0_101] : memref<8x128xf32, #tpu.memory_space<vmem>>, vector<8x128xf32>
    tpu.vector_store %arg7[%c0_100, %c0_101], %326 {strides = array<i32>} : memref<8x128xf32, #tpu.memory_space<vmem>>, vector<8x128xf32>,
    return
  }
  func.func @transform_0(%arg0: i32) -> (i32, i32, i32) {
    %c0_i32 = arith.constant 0 : i32
    %c0_i32_0 = arith.constant 0 : i32
    %c0_i32_1 = arith.constant 0 : i32
    return %arg0, %c0_i32, %c0_i32_0 : i32, i32, i32
  }
  func.func @transform_1(%arg0: i32) -> (i32, i32, i32) {
    %c0_i32 = arith.constant 0 : i32
    %c0_i32_0 = arith.constant 0 : i32
    %c0_i32_1 = arith.constant 0 : i32
    return %arg0, %c0_i32, %c0_i32_0 : i32, i32, i32
  }
  func.func @transform_2(%arg0: i32) -> (i32, i32) {
    %c0_i32 = arith.constant 0 : i32
    %c0_i32_0 = arith.constant 0 : i32
    %c0_i32_1 = arith.constant 0 : i32
    return %c0_i32, %c0_i32_0 : i32, i32
  }
  func.func @transform_3(%arg0: i32) -> (i32, i32) {
    %c0_i32 = arith.constant 0 : i32
    %c0_i32_0 = arith.constant 0 : i32
    %c0_i32_1 = arith.constant 0 : i32
    return %c0_i32, %c0_i32_0 : i32, i32
  }
  func.func @transform_4(%arg0: i32) -> (i32, i32) {
    %c0_i32 = arith.constant 0 : i32
    %c0_i32_0 = arith.constant 0 : i32
    %c0_i32_1 = arith.constant 0 : i32
    return %c0_i32, %c0_i32_0 : i32, i32
  }
  func.func @transform_5(%arg0: i32) -> (i32, i32, i32) {
    %c0_i32 = arith.constant 0 : i32
    %c0_i32_0 = arith.constant 0 : i32
    %c0_i32_1 = arith.constant 0 : i32
    return %arg0, %c0_i32, %c0_i32_0 : i32, i32, i32
  }
  func.func @transform_6(%arg0: i32) -> (i32, i32) {
    %c0_i32 = arith.constant 0 : i32
    %c0_i32_0 = arith.constant 0 : i32
    %c0_i32_1 = arith.constant 0 : i32
    return %c0_i32, %c0_i32_0 : i32, i32
  }
}

</mosaic_0001>

<llo_original>
// kernel: noisy_gru_rollout.1
$region0: #{noisy_gru_rollout.1}
  #allocation0 [shape = 'u32[]', space=smem, size = 0x4, offset = 0x4, fixed_abs, tag = 'smem constant byte address 0x4 - core index']
  #allocation1 [shape = 'u32[144,128]{1,0:T(1,128)}', space=vmem, size = 0x12000, scoped, tag = 'internal scratch']
  %s0 = inlined_call_operand.vmem [shape: f32[16,8,384], index: 0, kind: input, shape index: {}]
  %s1 = inlined_call_operand.vmem [shape: f32[16,8,128], index: 1, kind: input, shape index: {}]
  %s2 = inlined_call_operand.vmem [shape: f32[8,128], index: 2, kind: input, shape index: {}]
  %s3 = inlined_call_operand.vmem [shape: f32[128,384], index: 3, kind: input, shape index: {}]
  %s4 = inlined_call_operand.vmem [shape: f32[1,128], index: 4, kind: input, shape index: {}]
  %s5 = inlined_call_operand.vmem [shape: f32[16,8,128], index: 5, kind: output, shape index: {0}]
  %s6 = inlined_call_operand.vmem [shape: f32[8,128], index: 6, kind: output, shape index: {1}]
  %7 = xla_tuple %s5, %s6
  %s8 = sld [smem:[#allocation0]]
  $region65: #{noisy_gru_rollout.1} parent=0
    _
  %s10 = ssub.s32 1, %s8
  %s11 = scalar_select 0, %s10, %s8
  loop: start=0, step=1, limit=4
  $region2: #{noisy_gru_rollout.1} parent=0 // loop_pre_header
    _
  $region3: #{noisy_gru_rollout.1} parent=0 // loop_header
    %s13 = sphi 0, %s17
    %p14 = scmp.ge.s32.totalorder %s13, 4
    %s23 = sphi 0, %s25
    %s26 = sphi 0, %s23
    %s27 = sphi 0, %s26
    %s43 = sphi 0, %s27
    %s49 = sphi 0, %s51
    %s52 = sphi 0, %s49
    %s53 = sphi 0, %s52
    %s69 = sphi 0, %s53
    %s73 = sphi 0, %s73
    %s75 = sphi 0, %s73
    %s76 = sphi 0, %s75
    %s90 = sphi 0, %s76
    %s94 = sphi 0, %s94
    %s96 = sphi 0, %s94
    %s97 = sphi 0, %s96
    %s111 = sphi 0, %s97
    %s115 = sphi 0, %s115
    %s117 = sphi 0, %s115
    %s118 = sphi 0, %s117
    %s132 = sphi 0, %s118
    %s138 = sphi 0, %s140
    %s141 = sphi 0, %s138
    %s142 = sphi 0, %s141
    %s158 = sphi 0, %s142
    %s162 = sphi 0, %s162
    %s164 = sphi 0, %s162
    %s165 = sphi 0, %s164
    %s179 = sphi 0, %s165
  $region4: #{noisy_gru_rollout.1} parent=0 // loop_header_branch
    %16 = sbr.rel (%p14) target = $region8
  $region5: #{noisy_gru_rollout.1} parent=0 // loop_body
    %s18 = ssub.s32 %s13, 1
    %s19 = ssub.s32 %s13, 2
    %s20 = sadd.s32 %s13, 1
    %s21 = ssub.s32 %s13, %s20
    %p22 = scmp.eq.s32.totalorder %s21, 0
    %s24 = sadd.s32 %s23, 1
    %s25 = scalar_select %p22, %s23, %s24
    %p28 = pneg %p22
    %p29 = scmp.eq.s32.totalorder %s13, 1
    %p30 = por %p28, %p29
    %p31 = scmp.ne.s32.totalorder %s23, %s26
    %p32 = scmp.eq.s32.totalorder %s13, 0
    %p33 = por %p31, %p32
    %p34 = scmp.ne.s32.totalorder %s23, %s26
    %p35 = scmp.eq.s32.totalorder %s18, 1
    %p36 = por %p34, %p35
    %p37 = scmp.ne.s32.totalorder %s26, %s27
    %p38 = scmp.eq.s32.totalorder %s18, 0
    %p39 = por %p37, %p38
    %p40 = scmp.ne.s32.totalorder %s26, %s27
    %p41 = scmp.eq.s32.totalorder %s19, 1
    %p42 = por %p40, %p41
    %p44 = scmp.ne.s32.totalorder %s27, %s43
    %p45 = scmp.eq.s32.totalorder %s19, 0
    %p46 = por %p44, %p45
    %s47 = ssub.s32 %s13, %s20
    %p48 = scmp.eq.s32.totalorder %s47, 0
    %s50 = sadd.s32 %s49, 1
    %s51 = scalar_select %p48, %s49, %s50
    %p54 = pneg %p48
    %p55 = scmp.eq.s32.totalorder %s13, 1
    %p56 = por %p54, %p55
    %p57 = scmp.ne.s32.totalorder %s49, %s52
    %p58 = scmp.eq.s32.totalorder %s13, 0
    %p59 = por %p57, %p58
    %p60 = scmp.ne.s32.totalorder %s49, %s52
    %p61 = scmp.eq.s32.totalorder %s18, 1
    %p62 = por %p60, %p61
    %p63 = scmp.ne.s32.totalorder %s52, %s53
    %p64 = scmp.eq.s32.totalorder %s18, 0
    %p65 = por %p63, %p64
    %p66 = scmp.ne.s32.totalorder %s52, %s53
    %p67 = scmp.eq.s32.totalorder %s19, 1
    %p68 = por %p66, %p67
    %p70 = scmp.ne.s32.totalorder %s53, %s69
    %p71 = scmp.eq.s32.totalorder %s19, 0
    %p72 = por %p70, %p71
    %s74 = sadd.s32 %s73, 1
    %p77 = scmp.eq.s32.totalorder %s13, 1
    %p78 = scmp.ne.s32.totalorder %s73, %s75
    %p79 = scmp.eq.s32.totalorder %s13, 0
    %p80 = por %p78, %p79
    %p81 = scmp.ne.s32.totalorder %s73, %s75
    %p82 = scmp.eq.s32.totalorder %s18, 1
    %p83 = por %p81, %p82
    %p84 = scmp.ne.s32.totalorder %s75, %s76
    %p85 = scmp.eq.s32.totalorder %s18, 0
    %p86 = por %p84, %p85
    %p87 = scmp.ne.s32.totalorder %s75, %s76
    %p88 = scmp.eq.s32.totalorder %s19, 1
    %p89 = por %p87, %p88
    %p91 = scmp.ne.s32.totalorder %s76, %s90
    %p92 = scmp.eq.s32.totalorder %s19, 0
    %p93 = por %p91, %p92
    %s95 = sadd.s32 %s94, 1
    %p98 = scmp.eq.s32.totalorder %s13, 1
    %p99 = scmp.ne.s32.totalorder %s94, %s96
    %p100 = scmp.eq.s32.totalorder %s13, 0
    %p101 = por %p99, %p100
    %p102 = scmp.ne.s32.totalorder %s94, %s96
    %p103 = scmp.eq.s32.totalorder %s18, 1
    %p104 = por %p102, %p103
    %p105 = scmp.ne.s32.totalorder %s96, %s97
    %p106 = scmp.eq.s32.totalorder %s18, 0
    %p107 = por %p105, %p106
    %p108 = scmp.ne.s32.totalorder %s96, %s97
    %p109 = scmp.eq.s32.totalorder %s19, 1
    %p110 = por %p108, %p109
    %p112 = scmp.ne.s32.totalorder %s97, %s111
    %p113 = scmp.eq.s32.totalorder %s19, 0
    %p114 = por %p112, %p113
    %s116 = sadd.s32 %s115, 1
    %p119 = scmp.eq.s32.totalorder %s13, 1
    %p120 = scmp.ne.s32.totalorder %s115, %s117
    %p121 = scmp.eq.s32.totalorder %s13, 0
    %p122 = por %p120, %p121
    %p123 = scmp.ne.s32.totalorder %s115, %s117
    %p124 = scmp.eq.s32.totalorder %s18, 1
    %p125 = por %p123, %p124
    %p126 = scmp.ne.s32.totalorder %s117, %s118
    %p127 = scmp.eq.s32.totalorder %s18, 0
    %p128 = por %p126, %p127
    %p129 = scmp.ne.s32.totalorder %s117, %s118
    %p130 = scmp.eq.s32.totalorder %s19, 1
    %p131 = por %p129, %p130
    %p133 = scmp.ne.s32.totalorder %s118, %s132
    %p134 = scmp.eq.s32.totalorder %s19, 0
    %p135 = por %p133, %p134
    %s136 = ssub.s32 %s13, %s20
    %p137 = scmp.eq.s32.totalorder %s136, 0
    %s139 = sadd.s32 %s138, 1
    %s140 = scalar_select %p137, %s138, %s139
    %p143 = pneg %p137
    %p144 = scmp.eq.s32.totalorder %s13, 1
    %p145 = por %p143, %p144
    %p146 = scmp.ne.s32.totalorder %s138, %s141
    %p147 = scmp.eq.s32.totalorder %s13, 0
    %p148 = por %p146, %p147
    %p149 = scmp.ne.s32.totalorder %s138, %s141
    %p150 = scmp.eq.s32.totalorder %s18, 1
    %p151 = por %p149, %p150
    %p152 = scmp.ne.s32.totalorder %s141, %s142
    %p153 = scmp.eq.s32.totalorder %s18, 0
    %p154 = por %p152, %p153
    %p155 = scmp.ne.s32.totalorder %s141, %s142
    %p156 = scmp.eq.s32.totalorder %s19, 1
    %p157 = por %p155, %p156
    %p159 = scmp.ne.s32.totalorder %s142, %s158
    %p160 = scmp.eq.s32.totalorder %s19, 0
    %p161 = por %p159, %p160
    %s163 = sadd.s32 %s162, 1
    %p166 = scmp.eq.s32.totalorder %s13, 1
    %p167 = scmp.ne.s32.totalorder %s162, %s164
    %p168 = scmp.eq.s32.totalorder %s13, 0
    %p169 = por %p167, %p168
    %p170 = scmp.ne.s32.totalorder %s162, %s164
    %p171 = scmp.eq.s32.totalorder %s18, 1
    %p172 = por %p170, %p171
    %p173 = scmp.ne.s32.totalorder %s164, %s165
    %p174 = scmp.eq.s32.totalorder %s18, 0
    %p175 = por %p173, %p174
    %p176 = scmp.ne.s32.totalorder %s164, %s165
    %p177 = scmp.eq.s32.totalorder %s19, 1
    %p178 = por %p176, %p177
    %p180 = scmp.ne.s32.totalorder %s165, %s179
    %p181 = scmp.eq.s32.totalorder %s19, 0
    %p182 = por %p180, %p181
    %p183 = scmp.le.s32.totalorder 1, %s13
    %p184 = scmp.lt.s32.totalorder %s13, 3
    %p185 = pnand %p183, %p184
    %p186 = pneg %p185
    // Predicated region
    $region9: #{noisy_gru_rollout.1} parent=5 // pred_check
      _
    $region10: #{noisy_gru_rollout.1} parent=5 // pred_check_branch
      %188 = sbr.rel (%p185) target = $region12
    $region11: #{noisy_gru_rollout.1} parent=5 // pred_region
      %s189 = ssub.s32 %s13, 1
      // Predicated region
      $region13: #{noisy_gru_rollout.1} parent=11 // pred_check
        %p190 = pneg %p86
      $region14: #{noisy_gru_rollout.1} parent=11 // pred_check_branch
        %192 = sbr.rel (%p190) target = $region16
      $region15: #{noisy_gru_rollout.1} parent=11 // pred_region
        _
      $region16: #{noisy_gru_rollout.1} parent=11 // pred_fallthru
        _
      // Predicated region
      $region17: #{noisy_gru_rollout.1} parent=11 // pred_check
        %p193 = pneg %p107
      $region18: #{noisy_gru_rollout.1} parent=11 // pred_check_branch
        %195 = sbr.rel (%p193) target = $region20
      $region19: #{noisy_gru_rollout.1} parent=11 // pred_region
        _
      $region20: #{noisy_gru_rollout.1} parent=11 // pred_fallthru
        _
      // Predicated region
      $region21: #{noisy_gru_rollout.1} parent=11 // pred_check
        %p196 = pneg %p128
      $region22: #{noisy_gru_rollout.1} parent=11 // pred_check_branch
        %198 = sbr.rel (%p196) target = $region24
      $region23: #{noisy_gru_rollout.1} parent=11 // pred_region
        _
      $region24: #{noisy_gru_rollout.1} parent=11 // pred_fallthru
        _
    $region12: #{noisy_gru_rollout.1} parent=5 // pred_fallthru
      _
    %p199 = scmp.lt.s32.totalorder %s13, 2
    // Predicated region
    $region25: #{noisy_gru_rollout.1} parent=5 // pred_check
      %p200 = pneg %p199
    $region26: #{noisy_gru_rollout.1} parent=5 // pred_check_branch
      %202 = sbr.rel (%p200) target = $region28
    $region27: #{noisy_gru_rollout.1} parent=5 // pred_region
      // Predicated region
      $region29: #{noisy_gru_rollout.1} parent=27 // pred_check
        %p203 = pneg %p33
      $region30: #{noisy_gru_rollout.1} parent=27 // pred_check_branch
        %205 = sbr.rel (%p203) target = $region32
      $region31: #{noisy_gru_rollout.1} parent=27 // pred_region
        %s206 = smul.u32 8, %s13
        %p207 = scmp.lt.s32.totalorder %s206, 15
        %s208 = scalar_select %p207, %s206, 15
        %s209 = smul.addr %s208, 3
        %s210 = smul.addr %s209, 8
        %s211 = scalar_lea.vmem %s0, %s210
        %s212 = smul.u32 8, %s13
      $region32: #{noisy_gru_rollout.1} parent=27 // pred_fallthru
        _
      // Predicated region
      $region33: #{noisy_gru_rollout.1} parent=27 // pred_check
        %p213 = pneg %p59
      $region34: #{noisy_gru_rollout.1} parent=27 // pred_check_branch
        %215 = sbr.rel (%p213) target = $region36
      $region35: #{noisy_gru_rollout.1} parent=27 // pred_region
        %s216 = smul.u32 8, %s13
        %p217 = scmp.lt.s32.totalorder %s216, 15
        %s218 = scalar_select %p217, %s216, 15
        %s219 = smul.addr %s218, 8
        %s220 = scalar_lea.vmem %s1, %s219
        %s221 = smul.u32 8, %s13
      $region36: #{noisy_gru_rollout.1} parent=27 // pred_fallthru
        _
    $region28: #{noisy_gru_rollout.1} parent=5 // pred_fallthru
      _
    %p222 = scmp.le.s32.totalorder 1, %s13
    %p223 = scmp.lt.s32.totalorder %s13, 3
    %p224 = pnand %p222, %p223
    %p225 = pneg %p224
    // Predicated region
    $region37: #{noisy_gru_rollout.1} parent=5 // pred_check
      _
    $region38: #{noisy_gru_rollout.1} parent=5 // pred_check_branch
      %227 = sbr.rel (%p224) target = $region40
    $region39: #{noisy_gru_rollout.1} parent=5 // pred_region
      %s228 = ssub.s32 %s13, 1
      %s229 = smul.u32 8, %s18
      %p230 = scmp.lt.s32.totalorder %s229, 15
      %s231 = scalar_select %p230, %s229, 15
      %s232 = smul.addr %s231, 3
      %s233 = smul.addr %s232, 8
      %s234 = scalar_lea.vmem %s0, %s233
      %p235 = pneg %p39
      %p236 = pneg %p36
      %s237 = smul.u32 8, %s18
      %p238 = scmp.lt.s32.totalorder %s237, 15
      %s239 = scalar_select %p238, %s237, 15
      %s240 = smul.addr %s239, 8
      %s241 = scalar_lea.vmem %s1, %s240
      %p242 = pneg %p65
      %p243 = pneg %p62
      %p244 = pneg %p86
      %p245 = pneg %p83
      %p246 = pneg %p107
      %p247 = pneg %p104
      %p248 = pneg %p128
      %p249 = pneg %p125
      %p250 = pneg %p154
      %p251 = pneg %p151
      %s252 = smul.u32 8, %s18
      %p253 = scmp.lt.s32.totalorder %s252, 15
      %s254 = scalar_select %p253, %s252, 15
      %s255 = smul.addr %s254, 8
      %s256 = scalar_lea.vmem %s5, %s255
      %p257 = pneg %p175
      %p258 = pneg %p172
      %s259 = smul.u32 8, %s18
      %p260 = scmp.lt.s32.totalorder %s259, 15
      %s261 = scalar_select %p260, %s259, 15
      %s262 = smul.addr %s261, 3
      %s263 = smul.addr %s262, 8
      %s264 = scalar_lea.vmem %s0, %s263
      %s265 = smul.u32 8, %s18
      %s266 = smul.u32 8, %s18
      %p267 = scmp.lt.s32.totalorder %s266, 15
      %s268 = scalar_select %p267, %s266, 15
      %s269 = smul.addr %s268, 8
      %s270 = scalar_lea.vmem %s1, %s269
      %s271 = smul.u32 8, %s18
      %s272 = smul.u32 8, %s18
      %p273 = scmp.lt.s32.totalorder %s272, 15
      %s274 = scalar_select %p273, %s272, 15
      %s275 = smul.addr %s274, 8
      %s276 = scalar_lea.vmem %s5, %s275
      %s277 = smul.u32 8, %s18
      %p278 = scmp.eq.s32.totalorder %s18, 0
      // Predicated region
      $region41: #{noisy_gru_rollout.1} parent=39 // pred_check
        %p279 = pneg %p278
      $region42: #{noisy_gru_rollout.1} parent=39 // pred_check_branch
        %281 = sbr.rel (%p279) target = $region44
      $region43: #{noisy_gru_rollout.1} parent=39 // pred_region
        %v282 = vld [vmem:[%s2] sm:$0xff]
        %283 = vst [vmem:[%s6] sm:$0xff] %v282
      $region44: #{noisy_gru_rollout.1} parent=39 // pred_fallthru
        _
      %v284 = vld [vmem:[%s4] sm:$0x1]
      %v286 = vlaneseq
      %v287 = vshrl.u32 %v286, 7
      %v288 = vsub.s32 0, %v287
      %v289 = vrot.slane %v284, %v288
      %v291 = vld [vmem:[%s6] sm:$0xff]
      %v292 = vld [vmem:[%s264] sm:$0xff]
      %v293 = vld [vmem:[%s264 + $0x8] sm:$0xff]
      %v294 = vld [vmem:[%s264 + $0x10] sm:$0xff]
      %v295 = vld [vmem:[%s3] sm:$0xff]
      %v296 = vld [vmem:[%s3 + $0x8] sm:$0xff]
      %v297 = vld [vmem:[%s3 + $0x10] sm:$0xff]
      %v298 = vld [vmem:[%s3 + $0x18] sm:$0xff]
      %v299 = vld [vmem:[%s3 + $0x20] sm:$0xff]
      %v300 = vld [vmem:[%s3 + $0x28] sm:$0xff]
      %v301 = vld [vmem:[%s3 + $0x30] sm:$0xff]
      %v302 = vld [vmem:[%s3 + $0x38] sm:$0xff]
      %v303 = vld [vmem:[%s3 + $0x40] sm:$0xff]
      %v304 = vld [vmem:[%s3 + $0x48] sm:$0xff]
      %v305 = vld [vmem:[%s3 + $0x50] sm:$0xff]
      %v306 = vld [vmem:[%s3 + $0x58] sm:$0xff]
      %v307 = vld [vmem:[%s3 + $0x60] sm:$0xff]
      %v308 = vld [vmem:[%s3 + $0x68] sm:$0xff]
      %v309 = vld [vmem:[%s3 + $0x70] sm:$0xff]
      %v310 = vld [vmem:[%s3 + $0x78] sm:$0xff]
      %v311 = vld [vmem:[%s3 + $0x80] sm:$0xff]
      %v312 = vld [vmem:[%s3 + $0x88] sm:$0xff]
      %v313 = vld [vmem:[%s3 + $0x90] sm:$0xff]
      %v314 = vld [vmem:[%s3 + $0x98] sm:$0xff]
      %v315 = vld [vmem:[%s3 + $0xa0] sm:$0xff]
      %v316 = vld [vmem:[%s3 + $0xa8] sm:$0xff]
      %v317 = vld [vmem:[%s3 + $0xb0] sm:$0xff]
      %v318 = vld [vmem:[%s3 + $0xb8] sm:$0xff]
      %v319 = vld [vmem:[%s3 + $0xc0] sm:$0xff]
      %v320 = vld [vmem:[%s3 + $0xc8] sm:$0xff]
      %v321 = vld [vmem:[%s3 + $0xd0] sm:$0xff]
      %v322 = vld [vmem:[%s3 + $0xd8] sm:$0xff]
      %v323 = vld [vmem:[%s3 + $0xe0] sm:$0xff]
      %v324 = vld [vmem:[%s3 + $0xe8] sm:$0xff]
      %v325 = vld [vmem:[%s3 + $0xf0] sm:$0xff]
      %v326 = vld [vmem:[%s3 + $0xf8] sm:$0xff]
      %v327 = vld [vmem:[%s3 + $0x100] sm:$0xff]
      %v328 = vld [vmem:[%s3 + $0x108] sm:$0xff]
      %v329 = vld [vmem:[%s3 + $0x110] sm:$0xff]
      %v330 = vld [vmem:[%s3 + $0x118] sm:$0xff]
      %v331 = vld [vmem:[%s3 + $0x120] sm:$0xff]
      %v332 = vld [vmem:[%s3 + $0x128] sm:$0xff]
      %v333 = vld [vmem:[%s3 + $0x130] sm:$0xff]
      %v334 = vld [vmem:[%s3 + $0x138] sm:$0xff]
      %v335 = vld [vmem:[%s3 + $0x140] sm:$0xff]
      %v336 = vld [vmem:[%s3 + $0x148] sm:$0xff]
      %v337 = vld [vmem:[%s3 + $0x150] sm:$0xff]
      %v338 = vld [vmem:[%s3 + $0x158] sm:$0xff]
      %v339 = vld [vmem:[%s3 + $0x160] sm:$0xff]
      %v340 = vld [vmem:[%s3 + $0x168] sm:$0xff]
      %v341 = vld [vmem:[%s3 + $0x170] sm:$0xff]
      %v342 = vld [vmem:[%s3 + $0x178] sm:$0xff]
      %343 = vmatprep.subr.mxu0 %v341
      %344 = vmatpush1.msra.mxu0 %v340
      %345 = vmatprep.subr.mxu0 %v338
      %346 = vmatpush1.msra.mxu0 %v337
      %347 = vmatprep.subr.mxu0 %v335
      %348 = vmatpush1.msra.mxu0 %v334
      %349 = vmatprep.subr.mxu0 %v332
      %350 = vmatpush1.msra.mxu0 %v331
      %351 = vmatprep.subr.mxu0 %v329
      %352 = vmatpush1.msra.mxu0 %v328
      %353 = vmatprep.subr.mxu0 %v326
      %354 = vmatpush1.msra.mxu0 %v325
      %355 = vmatprep.subr.mxu0 %v323
      %356 = vmatpush1.msra.mxu0 %v322
      %357 = vmatprep.subr.mxu0 %v320
      %358 = vmatpush1.msra.mxu0 %v319
      %359 = vmatprep.subr.mxu0 %v317
      %360 = vmatpush1.msra.mxu0 %v316
      %361 = vmatprep.subr.mxu0 %v314
      %362 = vmatpush1.msra.mxu0 %v313
      %363 = vmatprep.subr.mxu0 %v311
      %364 = vmatpush1.msra.mxu0 %v310
      %365 = vmatprep.subr.mxu0 %v308
      %366 = vmatpush1.msra.mxu0 %v307
      %367 = vmatprep.subr.mxu0 %v305
      %368 = vmatpush1.msra.mxu0 %v304
      %369 = vmatprep.subr.mxu0 %v302
      %370 = vmatpush1.msra.mxu0 %v301
      %371 = vmatprep.subr.mxu0 %v299
      %372 = vmatpush1.msra.mxu0 %v298
      %373 = vmatprep.subr.mxu0 %v296
      %374 = vmatpush1.msra.mxu0 %v295
      %375 = vmatprep.subr.mxu0 0.0
      %376 = vmatpush2.msra.mxu0 0.0
      %377 = vmatprep.subr.mxu0 0.0
      %378 = vmatpush2.msra.mxu0 0.0
      %379 = vmatprep.subr.mxu0 0.0
      %380 = vmatpush2.msra.mxu0 0.0
      %381 = vmatprep.subr.mxu0 0.0
      %382 = vmatpush2.msra.mxu0 0.0
      %383 = vmatprep.subr.mxu0 0.0
      %384 = vmatpush2.msra.mxu0 0.0
      %385 = vmatprep.subr.mxu0 0.0
      %386 = vmatpush2.msra.mxu0 0.0
      %387 = vmatprep.subr.mxu0 0.0
      %388 = vmatpush2.msra.mxu0 0.0
      %389 = vmatprep.subr.mxu0 0.0
      %390 = vmatpush2.msra.mxu0 0.0
      %391 = vmatprep.subr.mxu0 0.0
      %392 = vmatpush2.msra.mxu0 0.0
      %393 = vmatprep.subr.mxu0 0.0
      %394 = vmatpush2.msra.mxu0 0.0
      %395 = vmatprep.subr.mxu0 0.0
      %396 = vmatpush2.msra.mxu0 0.0
      %397 = vmatprep.subr.mxu0 0.0
      %398 = vmatpush2.msra.mxu0 0.0
      %399 = vmatprep.subr.mxu0 0.0
      %400 = vmatpush2.msra.mxu0 0.0
      %401 = vmatprep.subr.mxu0 0.0
      %402 = vmatpush2.msra.mxu0 0.0
      %403 = vmatprep.subr.mxu0 0.0
      %404 = vmatpush2.msra.mxu0 0.0
      %405 = vmatprep.subr.mxu0 0.0
      %406 = vmatpush2.msra.mxu0 0.0
      %407 = vmatprep.mubr.f32.mxu0 0.0
      %408 = vmatmul.mubr.f32.gmra.mxu0 %v291
      %v409 = vpop.f32.mrf.mxu0
      %v410 = vadd.f32 0.0, %v409
      %v411 = vpop.f32.mrf.mxu0
      %v412 = vadd.f32 0.0, %v411
      %413 = vdwg.mxu0
      %414 = vmatprep.subr.mxu0 0.0
      %415 = vmatpush1.msra.mxu0 %v342
      %416 = vmatprep.subr.mxu0 0.0
      %417 = vmatpush1.msra.mxu0 %v339
      %418 = vmatprep.subr.mxu0 0.0
      %419 = vmatpush1.msra.mxu0 %v336
      %420 = vmatprep.subr.mxu0 0.0
      %421 = vmatpush1.msra.mxu0 %v333
      %422 = vmatprep.subr.mxu0 0.0
      %423 = vmatpush1.msra.mxu0 %v330
      %424 = vmatprep.subr.mxu0 0.0
      %425 = vmatpush1.msra.mxu0 %v327
      %426 = vmatprep.subr.mxu0 0.0
      %427 = vmatpush1.msra.mxu0 %v324
      %428 = vmatprep.subr.mxu0 0.0
      %429 = vmatpush1.msra.mxu0 %v321
      %430 = vmatprep.subr.mxu0 0.0
      %431 = vmatpush1.msra.mxu0 %v318
      %432 = vmatprep.subr.mxu0 0.0
      %433 = vmatpush1.msra.mxu0 %v315
      %434 = vmatprep.subr.mxu0 0.0
      %435 = vmatpush1.msra.mxu0 %v312
      %436 = vmatprep.subr.mxu0 0.0
      %437 = vmatpush1.msra.mxu0 %v309
      %438 = vmatprep.subr.mxu0 0.0
      %439 = vmatpush1.msra.mxu0 %v306
      %440 = vmatprep.subr.mxu0 0.0
      %441 = vmatpush1.msra.mxu0 %v303
      %442 = vmatprep.subr.mxu0 0.0
      %443 = vmatpush1.msra.mxu0 %v300
      %444 = vmatprep.subr.mxu0 0.0
      %445 = vmatpush1.msra.mxu0 %v297
      %446 = vmatprep.subr.mxu0 0.0
      %447 = vmatpush2.msra.mxu0 0.0
      %448 = vmatprep.subr.mxu0 0.0
      %449 = vmatpush2.msra.mxu0 0.0
      %450 = vmatprep.subr.mxu0 0.0
      %451 = vmatpush2.msra.mxu0 0.0
      %452 = vmatprep.subr.mxu0 0.0
      %453 = vmatpush2.msra.mxu0 0.0
      %454 = vmatprep.subr.mxu0 0.0
      %455 = vmatpush2.msra.mxu0 0.0
      %456 = vmatprep.subr.mxu0 0.0
      %457 = vmatpush2.msra.mxu0 0.0
      %458 = vmatprep.subr.mxu0 0.0
      %459 = vmatpush2.msra.mxu0 0.0
      %460 = vmatprep.subr.mxu0 0.0
      %461 = vmatpush2.msra.mxu0 0.0
      %462 = vmatprep.subr.mxu0 0.0
      %463 = vmatpush2.msra.mxu0 0.0
      %464 = vmatprep.subr.mxu0 0.0
      %465 = vmatpush2.msra.mxu0 0.0
      %466 = vmatprep.subr.mxu0 0.0
      %467 = vmatpush2.msra.mxu0 0.0
      %468 = vmatprep.subr.mxu0 0.0
      %469 = vmatpush2.msra.mxu0 0.0
      %470 = vmatprep.subr.mxu0 0.0
      %471 = vmatpush2.msra.mxu0 0.0
      %472 = vmatprep.subr.mxu0 0.0
      %473 = vmatpush2.msra.mxu0 0.0
      %474 = vmatprep.subr.mxu0 0.0
      %475 = vmatpush2.msra.mxu0 0.0
      %476 = vmatprep.subr.mxu0 0.0
      %477 = vmatpush2.msra.mxu0 0.0
      %478 = vmatprep.mubr.f32.mxu0 0.0
      %479 = vmatmul.mubr.f32.gmra.mxu0 %v291
      %v480 = vpop.f32.mrf.mxu0
      %v481 = vadd.f32 0.0, %v480
      %v482 = vpop.f32.mrf.mxu0
      %483 = vdwg.mxu0
      %v484 = vadd.f32 %v292, %v410
      %v485 = vxor.u32 %v484, 2147483648
      %v486 = vmul.f32 %v485, 1.442695
      %v487 = vpow.pop %v486
      %v488 = vadd.f32 %v487, 1.0
      %v489 = vrcp.pop %v488
      %v490 = vmul.f32 1.0, %v489
      %v491 = vadd.f32 %v293, %v412
      %v492 = vxor.u32 %v491, 2147483648
      %v493 = vmul.f32 %v492, 1.442695
      %v494 = vpow.pop %v493
      %v495 = vadd.f32 %v494, 1.0
      %v496 = vrcp.pop %v495
      %v497 = vmul.f32 1.0, %v496
      %v498 = vadd.f32 %v481, %v289
      %v499 = vmul.f32 %v490, %v498
      %v500 = vadd.f32 %v294, %v499
      %v501 = vtanh.pop %v500
      %v502 = vsub.f32 1.0, %v497
      %v503 = vmul.f32 %v502, %v501
      %v504 = vmul.f32 %v497, %v291
      %v505 = vadd.f32 %v503, %v504
      %506 = vst [vmem:[%s276] sm:$0xff] %v505
      %v507 = vld [vmem:[%s270] sm:$0xff]
      %v508 = vadd.f32 %v505, %v507
      %s509 = scalar_lea.vmem %s264, 24
      %v510 = vld [vmem:[%s509] sm:$0xff]
      %v511 = vld [vmem:[%s509 + $0x8] sm:$0xff]
      %v512 = vld [vmem:[%s509 + $0x10] sm:$0xff]
      %v513 = vld [vmem:[%s3] sm:$0xff]
      %v514 = vld [vmem:[%s3 + $0x8] sm:$0xff]
      %v515 = vld [vmem:[%s3 + $0x10] sm:$0xff]
      %v516 = vld [vmem:[%s3 + $0x18] sm:$0xff]
      %v517 = vld [vmem:[%s3 + $0x20] sm:$0xff]
      %v518 = vld [vmem:[%s3 + $0x28] sm:$0xff]
      %v519 = vld [vmem:[%s3 + $0x30] sm:$0xff]
      %v520 = vld [vmem:[%s3 + $0x38] sm:$0xff]
      %v521 = vld [vmem:[%s3 + $0x40] sm:$0xff]
      %v522 = vld [vmem:[%s3 + $0x48] sm:$0xff]
      %v523 = vld [vmem:[%s3 + $0x50] sm:$0xff]
      %v524 = vld [vmem:[%s3 + $0x58] sm:$0xff]
      %v525 = vld [vmem:[%s3 + $0x60] sm:$0xff]
      %v526 = vld [vmem:[%s3 + $0x68] sm:$0xff]
      %v527 = vld [vmem:[%s3 + $0x70] sm:$0xff]
      %v528 = vld [vmem:[%s3 + $0x78] sm:$0xff]
      %v529 = vld [vmem:[%s3 + $0x80] sm:$0xff]
      %v530 = vld [vmem:[%s3 + $0x88] sm:$0xff]
      %v531 = vld [vmem:[%s3 + $0x90] sm:$0xff]
      %v532 = vld [vmem:[%s3 + $0x98] sm:$0xff]
      %v533 = vld [vmem:[%s3 + $0xa0] sm:$0xff]
      %v534 = vld [vmem:[%s3 + $0xa8] sm:$0xff]
      %v535 = vld [vmem:[%s3 + $0xb0] sm:$0xff]
      %v536 = vld [vmem:[%s3 + $0xb8] sm:$0xff]
      %v537 = vld [vmem:[%s3 + $0xc0] sm:$0xff]
      %v538 = vld [vmem:[%s3 + $0xc8] sm:$0xff]
      %v539 = vld [vmem:[%s3 + $0xd0] sm:$0xff]
      %v540 = vld [vmem:[%s3 + $0xd8] sm:$0xff]
      %v541 = vld [vmem:[%s3 + $0xe0] sm:$0xff]
      %v542 = vld [vmem:[%s3 + $0xe8] sm:$0xff]
      %v543 = vld [vmem:[%s3 + $0xf0] sm:$0xff]
      %v544 = vld [vmem:[%s3 + $0xf8] sm:$0xff]
      %v545 = vld [vmem:[%s3 + $0x100] sm:$0xff]
      %v546 = vld [vmem:[%s3 + $0x108] sm:$0xff]
      %v547 = vld [vmem:[%s3 + $0x110] sm:$0xff]
      %v548 = vld [vmem:[%s3 + $0x118] sm:$0xff]
      %v549 = vld [vmem:[%s3 + $0x120] sm:$0xff]
      %v550 = vld [vmem:[%s3 + $0x128] sm:$0xff]
      %v551 = vld [vmem:[%s3 + $0x130] sm:$0xff]
      %v552 = vld [vmem:[%s3 + $0x138] sm:$0xff]
      %v553 = vld [vmem:[%s3 + $0x140] sm:$0xff]
      %v554 = vld [vmem:[%s3 + $0x148] sm:$0xff]
      %v555 = vld [vmem:[%s3 + $0x150] sm:$0xff]
      %v556 = vld [vmem:[%s3 + $0x158] sm:$0xff]
      %v557 = vld [vmem:[%s3 + $0x160] sm:$0xff]
      %v558 = vld [vmem:[%s3 + $0x168] sm:$0xff]
      %v559 = vld [vmem:[%s3 + $0x170] sm:$0xff]
      %v560 = vld [vmem:[%s3 + $0x178] sm:$0xff]
      %561 = vmatprep.subr.mxu0 %v559
      %562 = vmatpush1.msra.mxu0 %v558
      %563 = vmatprep.subr.mxu0 %v556
      %564 = vmatpush1.msra.mxu0 %v555
      %565 = vmatprep.subr.mxu0 %v553
      %566 = vmatpush1.msra.mxu0 %v552
      %567 = vmatprep.subr.mxu0 %v550
      %568 = vmatpush1.msra.mxu0 %v549
      %569 = vmatprep.subr.mxu0 %v547
      %570 = vmatpush1.msra.mxu0 %v546
      %571 = vmatprep.subr.mxu0 %v544
      %572 = vmatpush1.msra.mxu0 %v543
      %573 = vmatprep.subr.mxu0 %v541
      %574 = vmatpush1.msra.mxu0 %v540
      %575 = vmatprep.subr.mxu0 %v538
      %576 = vmatpush1.msra.mxu0 %v537
      %577 = vmatprep.subr.mxu0 %v535
      %578 = vmatpush1.msra.mxu0 %v534
      %579 = vmatprep.subr.mxu0 %v532
      %580 = vmatpush1.msra.mxu0 %v531
      %581 = vmatprep.subr.mxu0 %v529
      %582 = vmatpush1.msra.mxu0 %v528
      %583 = vmatprep.subr.mxu0 %v526
      %584 = vmatpush1.msra.mxu0 %v525
      %585 = vmatprep.subr.mxu0 %v523
      %586 = vmatpush1.msra.mxu0 %v522
      %587 = vmatprep.subr.mxu0 %v520
      %588 = vmatpush1.msra.mxu0 %v519
      %589 = vmatprep.subr.mxu0 %v517
      %590 = vmatpush1.msra.mxu0 %v516
      %591 = vmatprep.subr.mxu0 %v514
      %592 = vmatpush1.msra.mxu0 %v513
      %593 = vmatprep.subr.mxu0 0.0
      %594 = vmatpush2.msra.mxu0 0.0
      %595 = vmatprep.subr.mxu0 0.0
      %596 = vmatpush2.msra.mxu0 0.0
      %597 = vmatprep.subr.mxu0 0.0
      %598 = vmatpush2.msra.mxu0 0.0
      %599 = vmatprep.subr.mxu0 0.0
      %600 = vmatpush2.msra.mxu0 0.0
      %601 = vmatprep.subr.mxu0 0.0
      %602 = vmatpush2.msra.mxu0 0.0
      %603 = vmatprep.subr.mxu0 0.0
      %604 = vmatpush2.msra.mxu0 0.0
      %605 = vmatprep.subr.mxu0 0.0
      %606 = vmatpush2.msra.mxu0 0.0
      %607 = vmatprep.subr.mxu0 0.0
      %608 = vmatpush2.msra.mxu0 0.0
      %609 = vmatprep.subr.mxu0 0.0
      %610 = vmatpush2.msra.mxu0 0.0
      %611 = vmatprep.subr.mxu0 0.0
      %612 = vmatpush2.msra.mxu0 0.0
      %613 = vmatprep.subr.mxu0 0.0
      %614 = vmatpush2.msra.mxu0 0.0
      %615 = vmatprep.subr.mxu0 0.0
      %616 = vmatpush2.msra.mxu0 0.0
      %617 = vmatprep.subr.mxu0 0.0
      %618 = vmatpush2.msra.mxu0 0.0
      %619 = vmatprep.subr.mxu0 0.0
      %620 = vmatpush2.msra.mxu0 0.0
      %621 = vmatprep.subr.mxu0 0.0
      %622 = vmatpush2.msra.mxu0 0.0
      %623 = vmatprep.subr.mxu0 0.0
      %624 = vmatpush2.msra.mxu0 0.0
      %625 = vmatprep.mubr.f32.mxu0 0.0
      %626 = vmatmul.mubr.f32.gmra.mxu0 %v508
      %v627 = vpop.f32.mrf.mxu0
      %v628 = vadd.f32 0.0, %v627
      %v629 = vpop.f32.mrf.mxu0
      %v630 = vadd.f32 0.0, %v629
      %631 = vdwg.mxu0
      %632 = vmatprep.subr.mxu0 0.0
      %633 = vmatpush1.msra.mxu0 %v560
      %634 = vmatprep.subr.mxu0 0.0
      %635 = vmatpush1.msra.mxu0 %v557
      %636 = vmatprep.subr.mxu0 0.0
      %637 = vmatpush1.msra.mxu0 %v554
      %638 = vmatprep.subr.mxu0 0.0
      %639 = vmatpush1.msra.mxu0 %v551
      %640 = vmatprep.subr.mxu0 0.0
      %641 = vmatpush1.msra.mxu0 %v548
      %642 = vmatprep.subr.mxu0 0.0
      %643 = vmatpush1.msra.mxu0 %v545
      %644 = vmatprep.subr.mxu0 0.0
      %645 = vmatpush1.msra.mxu0 %v542
      %646 = vmatprep.subr.mxu0 0.0
      %647 = vmatpush1.msra.mxu0 %v539
      %648 = vmatprep.subr.mxu0 0.0
      %649 = vmatpush1.msra.mxu0 %v536
      %650 = vmatprep.subr.mxu0 0.0
      %651 = vmatpush1.msra.mxu0 %v533
      %652 = vmatprep.subr.mxu0 0.0
      %653 = vmatpush1.msra.mxu0 %v530
      %654 = vmatprep.subr.mxu0 0.0
      %655 = vmatpush1.msra.mxu0 %v527
      %656 = vmatprep.subr.mxu0 0.0
      %657 = vmatpush1.msra.mxu0 %v524
      %658 = vmatprep.subr.mxu0 0.0
      %659 = vmatpush1.msra.mxu0 %v521
      %660 = vmatprep.subr.mxu0 0.0
      %661 = vmatpush1.msra.mxu0 %v518
      %662 = vmatprep.subr.mxu0 0.0
      %663 = vmatpush1.msra.mxu0 %v515
      %664 = vmatprep.subr.mxu0 0.0
      %665 = vmatpush2.msra.mxu0 0.0
      %666 = vmatprep.subr.mxu0 0.0
      %667 = vmatpush2.msra.mxu0 0.0
      %668 = vmatprep.subr.mxu0 0.0
      %669 = vmatpush2.msra.mxu0 0.0
      %670 = vmatprep.subr.mxu0 0.0
      %671 = vmatpush2.msra.mxu0 0.0
      %672 = vmatprep.subr.mxu0 0.0
      %673 = vmatpush2.msra.mxu0 0.0
      %674 = vmatprep.subr.mxu0 0.0
      %675 = vmatpush2.msra.mxu0 0.0
      %676 = vmatprep.subr.mxu0 0.0
      %677 = vmatpush2.msra.mxu0 0.0
      %678 = vmatprep.subr.mxu0 0.0
      %679 = vmatpush2.msra.mxu0 0.0
      %680 = vmatprep.subr.mxu0 0.0
      %681 = vmatpush2.msra.mxu0 0.0
      %682 = vmatprep.subr.mxu0 0.0
      %683 = vmatpush2.msra.mxu0 0.0
      %684 = vmatprep.subr.mxu0 0.0
      %685 = vmatpush2.msra.mxu0 0.0
      %686 = vmatprep.subr.mxu0 0.0
      %687 = vmatpush2.msra.mxu0 0.0
      %688 = vmatprep.subr.mxu0 0.0
      %689 = vmatpush2.msra.mxu0 0.0
      %690 = vmatprep.subr.mxu0 0.0
      %691 = vmatpush2.msra.mxu0 0.0
      %692 = vmatprep.subr.mxu0 0.0
      %693 = vmatpush2.msra.mxu0 0.0
      %694 = vmatprep.subr.mxu0 0.0
      %695 = vmatpush2.msra.mxu0 0.0
      %696 = vmatprep.mubr.f32.mxu0 0.0
      %697 = vmatmul.mubr.f32.gmra.mxu0 %v508
      %v698 = vpop.f32.mrf.mxu0
      %v699 = vadd.f32 0.0, %v698
      %v700 = vpop.f32.mrf.mxu0
      %701 = vdwg.mxu0
      %v702 = vadd.f32 %v510, %v628
      %v703 = vxor.u32 %v702, 2147483648
      %v704 = vmul.f32 %v703, 1.442695
      %v705 = vpow.pop %v704
      %v706 = vadd.f32 %v705, 1.0
      %v707 = vrcp.pop %v706
      %v708 = vmul.f32 1.0, %v707
      %v709 = vadd.f32 %v511, %v630
      %v710 = vxor.u32 %v709, 2147483648
      %v711 = vmul.f32 %v710, 1.442695
      %v712 = vpow.pop %v711
      %v713 = vadd.f32 %v712, 1.0
      %v714 = vrcp.pop %v713
      %v715 = vmul.f32 1.0, %v714
      %v716 = vadd.f32 %v699, %v289
      %v717 = vmul.f32 %v708, %v716
      %v718 = vadd.f32 %v512, %v717
      %v719 = vtanh.pop %v718
      %v720 = vsub.f32 1.0, %v715
      %v721 = vmul.f32 %v720, %v719
      %v722 = vmul.f32 %v715, %v508
      %v723 = vadd.f32 %v721, %v722
      %s724 = scalar_lea.vmem %s276, 8
      %725 = vst [vmem:[%s724] sm:$0xff] %v723
      %s726 = scalar_lea.vmem %s270, 8
      %v727 = vld [vmem:[%s726] sm:$0xff]
      %v728 = vadd.f32 %v723, %v727
      %s729 = scalar_lea.vmem %s264, 48
      %v730 = vld [vmem:[%s729] sm:$0xff]
      %v731 = vld [vmem:[%s729 + $0x8] sm:$0xff]
      %v732 = vld [vmem:[%s729 + $0x10] sm:$0xff]
      %v733 = vld [vmem:[%s3] sm:$0xff]
      %v734 = vld [vmem:[%s3 + $0x8] sm:$0xff]
      %v735 = vld [vmem:[%s3 + $0x10] sm:$0xff]
      %v736 = vld [vmem:[%s3 + $0x18] sm:$0xff]
      %v737 = vld [vmem:[%s3 + $0x20] sm:$0xff]
      %v738 = vld [vmem:[%s3 + $0x28] sm:$0xff]
      %v739 = vld [vmem:[%s3 + $0x30] sm:$0xff]
      %v740 = vld [vmem:[%s3 + $0x38] sm:$0xff]
      %v741 = vld [vmem:[%s3 + $0x40] sm:$0xff]
      %v742 = vld [vmem:[%s3 + $0x48] sm:$0xff]
      %v743 = vld [vmem:[%s3 + $0x50] sm:$0xff]
      %v744 = vld [vmem:[%s3 + $0x58] sm:$0xff]
      %v745 = vld [vmem:[%s3 + $0x60] sm:$0xff]
      %v746 = vld [vmem:[%s3 + $0x68] sm:$0xff]
      %v747 = vld [vmem:[%s3 + $0x70] sm:$0xff]
      %v748 = vld [vmem:[%s3 + $0x78] sm:$0xff]
      %v749 = vld [vmem:[%s3 + $0x80] sm:$0xff]
      %v750 = vld [vmem:[%s3 + $0x88] sm:$0xff]
      %v751 = vld [vmem:[%s3 + $0x90] sm:$0xff]
      %v752 = vld [vmem:[%s3 + $0x98] sm:$0xff]
      %v753 = vld [vmem:[%s3 + $0xa0] sm:$0xff]
      %v754 = vld [vmem:[%s3 + $0xa8] sm:$0xff]
      %v755 = vld [vmem:[%s3 + $0xb0] sm:$0xff]
      %v756 = vld [vmem:[%s3 + $0xb8] sm:$0xff]
      %v757 = vld [vmem:[%s3 + $0xc0] sm:$0xff]
      %v758 = vld [vmem:[%s3 + $0xc8] sm:$0xff]
      %v759 = vld [vmem:[%s3 + $0xd0] sm:$0xff]
      %v760 = vld [vmem:[%s3 + $0xd8] sm:$0xff]
      %v761 = vld [vmem:[%s3 + $0xe0] sm:$0xff]
      %v762 = vld [vmem:[%s3 + $0xe8] sm:$0xff]
      %v763 = vld [vmem:[%s3 + $0xf0] sm:$0xff]
      %v764 = vld [vmem:[%s3 + $0xf8] sm:$0xff]
      %v765 = vld [vmem:[%s3 + $0x100] sm:$0xff]
      %v766 = vld [vmem:[%s3 + $0x108] sm:$0xff]
      %v767 = vld [vmem:[%s3 + $0x110] sm:$0xff]
      %v768 = vld [vmem:[%s3 + $0x118] sm:$0xff]
      %v769 = vld [vmem:[%s3 + $0x120] sm:$0xff]
      %v770 = vld [vmem:[%s3 + $0x128] sm:$0xff]
      %v771 = vld [vmem:[%s3 + $0x130] sm:$0xff]
      %v772 = vld [vmem:[%s3 + $0x138] sm:$0xff]
      %v773 = vld [vmem:[%s3 + $0x140] sm:$0xff]
      %v774 = vld [vmem:[%s3 + $0x148] sm:$0xff]
      %v775 = vld [vmem:[%s3 + $0x150] sm:$0xff]
      %v776 = vld [vmem:[%s3 + $0x158] sm:$0xff]
      %v777 = vld [vmem:[%s3 + $0x160] sm:$0xff]
      %v778 = vld [vmem:[%s3 + $0x168] sm:$0xff]
      %v779 = vld [vmem:[%s3 + $0x170] sm:$0xff]
      %v780 = vld [vmem:[%s3 + $0x178] sm:$0xff]
      %781 = vmatprep.subr.mxu0 %v779
      %782 = vmatpush1.msra.mxu0 %v778
      %783 = vmatprep.subr.mxu0 %v776
      %784 = vmatpush1.msra.mxu0 %v775
      %785 = vmatprep.subr.mxu0 %v773
      %786 = vmatpush1.msra.mxu0 %v772
      %787 = vmatprep.subr.mxu0 %v770
      %788 = vmatpush1.msra.mxu0 %v769
      %789 = vmatprep.subr.mxu0 %v767
      %790 = vmatpush1.msra.mxu0 %v766
      %791 = vmatprep.subr.mxu0 %v764
      %792 = vmatpush1.msra.mxu0 %v763
      %793 = vmatprep.subr.mxu0 %v761
      %794 = vmatpush1.msra.mxu0 %v760
      %795 = vmatprep.subr.mxu0 %v758
      %796 = vmatpush1.msra.mxu0 %v757
      %797 = vmatprep.subr.mxu0 %v755
      %798 = vmatpush1.msra.mxu0 %v754
      %799 = vmatprep.subr.mxu0 %v752
      %800 = vmatpush1.msra.mxu0 %v751
      %801 = vmatprep.subr.mxu0 %v749
      %802 = vmatpush1.msra.mxu0 %v748
      %803 = vmatprep.subr.mxu0 %v746
      %804 = vmatpush1.msra.mxu0 %v745
      %805 = vmatprep.subr.mxu0 %v743
      %806 = vmatpush1.msra.mxu0 %v742
      %807 = vmatprep.subr.mxu0 %v740
      %808 = vmatpush1.msra.mxu0 %v739
      %809 = vmatprep.subr.mxu0 %v737
      %810 = vmatpush1.msra.mxu0 %v736
      %811 = vmatprep.subr.mxu0 %v734
      %812 = vmatpush1.msra.mxu0 %v733
      %813 = vmatprep.subr.mxu0 0.0
      %814 = vmatpush2.msra.mxu0 0.0
      %815 = vmatprep.subr.mxu0 0.0
      %816 = vmatpush2.msra.mxu0 0.0
      %817 = vmatprep.subr.mxu0 0.0
      %818 = vmatpush2.msra.mxu0 0.0
      %819 = vmatprep.subr.mxu0 0.0
      %820 = vmatpush2.msra.mxu0 0.0
      %821 = vmatprep.subr.mxu0 0.0
      %822 = vmatpush2.msra.mxu0 0.0
      %823 = vmatprep.subr.mxu0 0.0
      %824 = vmatpush2.msra.mxu0 0.0
      %825 = vmatprep.subr.mxu0 0.0
      %826 = vmatpush2.msra.mxu0 0.0
      %827 = vmatprep.subr.mxu0 0.0
      %828 = vmatpush2.msra.mxu0 0.0
      %829 = vmatprep.subr.mxu0 0.0
      %830 = vmatpush2.msra.mxu0 0.0
      %831 = vmatprep.subr.mxu0 0.0
      %832 = vmatpush2.msra.mxu0 0.0
      %833 = vmatprep.subr.mxu0 0.0
      %834 = vmatpush2.msra.mxu0 0.0
      %835 = vmatprep.subr.mxu0 0.0
      %836 = vmatpush2.msra.mxu0 0.0
      %837 = vmatprep.subr.mxu0 0.0
      %838 = vmatpush2.msra.mxu0 0.0
      %839 = vmatprep.subr.mxu0 0.0
      %840 = vmatpush2.msra.mxu0 0.0
      %841 = vmatprep.subr.mxu0 0.0
      %842 = vmatpush2.msra.mxu0 0.0
      %843 = vmatprep.subr.mxu0 0.0
      %844 = vmatpush2.msra.mxu0 0.0
      %845 = vmatprep.mubr.f32.mxu0 0.0
      %846 = vmatmul.mubr.f32.gmra.mxu0 %v728
      %v847 = vpop.f32.mrf.mxu0
      %v848 = vadd.f32 0.0, %v847
      %v849 = vpop.f32.mrf.mxu0
      %v850 = vadd.f32 0.0, %v849
      %851 = vdwg.mxu0
      %852 = vmatprep.subr.mxu0 0.0
      %853 = vmatpush1.msra.mxu0 %v780
      %854 = vmatprep.subr.mxu0 0.0
      %855 = vmatpush1.msra.mxu0 %v777
      %856 = vmatprep.subr.mxu0 0.0
      %857 = vmatpush1.msra.mxu0 %v774
      %858 = vmatprep.subr.mxu0 0.0
      %859 = vmatpush1.msra.mxu0 %v771
      %860 = vmatprep.subr.mxu0 0.0
      %861 = vmatpush1.msra.mxu0 %v768
      %862 = vmatprep.subr.mxu0 0.0
      %863 = vmatpush1.msra.mxu0 %v765
      %864 = vmatprep.subr.mxu0 0.0
      %865 = vmatpush1.msra.mxu0 %v762
      %866 = vmatprep.subr.mxu0 0.0
      %867 = vmatpush1.msra.mxu0 %v759
      %868 = vmatprep.subr.mxu0 0.0
      %869 = vmatpush1.msra.mxu0 %v756
      %870 = vmatprep.subr.mxu0 0.0
      %871 = vmatpush1.msra.mxu0 %v753
      %872 = vmatprep.subr.mxu0 0.0
      %873 = vmatpush1.msra.mxu0 %v750
      %874 = vmatprep.subr.mxu0 0.0
      %875 = vmatpush1.msra.mxu0 %v747
      %876 = vmatprep.subr.mxu0 0.0
      %877 = vmatpush1.msra.mxu0 %v744
      %878 = vmatprep.subr.mxu0 0.0
      %879 = vmatpush1.msra.mxu0 %v741
      %880 = vmatprep.subr.mxu0 0.0
      %881 = vmatpush1.msra.mxu0 %v738
      %882 = vmatprep.subr.mxu0 0.0
      %883 = vmatpush1.msra.mxu0 %v735
      %884 = vmatprep.subr.mxu0 0.0
      %885 = vmatpush2.msra.mxu0 0.0
      %886 = vmatprep.subr.mxu0 0.0
      %887 = vmatpush2.msra.mxu0 0.0
      %888 = vmatprep.subr.mxu0 0.0
      %889 = vmatpush2.msra.mxu0 0.0
      %890 = vmatprep.subr.mxu0 0.0
      %891 = vmatpush2.msra.mxu0 0.0
      %892 = vmatprep.subr.mxu0 0.0
      %893 = vmatpush2.msra.mxu0 0.0
      %894 = vmatprep.subr.mxu0 0.0
      %895 = vmatpush2.msra.mxu0 0.0
      %896 = vmatprep.subr.mxu0 0.0
      %897 = vmatpush2.msra.mxu0 0.0
      %898 = vmatprep.subr.mxu0 0.0
      %899 = vmatpush2.msra.mxu0 0.0
      %900 = vmatprep.subr.mxu0 0.0
      %901 = vmatpush2.msra.mxu0 0.0
      %902 = vmatprep.subr.mxu0 0.0
      %903 = vmatpush2.msra.mxu0 0.0
      %904 = vmatprep.subr.mxu0 0.0
      %905 = vmatpush2.msra.mxu0 0.0
      %906 = vmatprep.subr.mxu0 0.0
      %907 = vmatpush2.msra.mxu0 0.0
      %908 = vmatprep.subr.mxu0 0.0
      %909 = vmatpush2.msra.mxu0 0.0
      %910 = vmatprep.subr.mxu0 0.0
      %911 = vmatpush2.msra.mxu0 0.0
      %912 = vmatprep.subr.mxu0 0.0
      %913 = vmatpush2.msra.mxu0 0.0
      %914 = vmatprep.subr.mxu0 0.0
      %915 = vmatpush2.msra.mxu0 0.0
      %916 = vmatprep.mubr.f32.mxu0 0.0
      %917 = vmatmul.mubr.f32.gmra.mxu0 %v728
      %v918 = vpop.f32.mrf.mxu0
      %v919 = vadd.f32 0.0, %v918
      %v920 = vpop.f32.mrf.mxu0
      %921 = vdwg.mxu0
      %v922 = vadd.f32 %v730, %v848
      %v923 = vxor.u32 %v922, 2147483648
      %v924 = vmul.f32 %v923, 1.442695
      %v925 = vpow.pop %v924
      %v926 = vadd.f32 %v925, 1.0
      %v927 = vrcp.pop %v926
      %v928 = vmul.f32 1.0, %v927
      %v929 = vadd.f32 %v731, %v850
      %v930 = vxor.u32 %v929, 2147483648
      %v931 = vmul.f32 %v930, 1.442695
      %v932 = vpow.pop %v931
      %v933 = vadd.f32 %v932, 1.0
      %v934 = vrcp.pop %v933
      %v935 = vmul.f32 1.0, %v934
      %v936 = vadd.f32 %v919, %v289
      %v937 = vmul.f32 %v928, %v936
      %v938 = vadd.f32 %v732, %v937
      %v939 = vtanh.pop %v938
      %v940 = vsub.f32 1.0, %v935
      %v941 = vmul.f32 %v940, %v939
      %v942 = vmul.f32 %v935, %v728
      %v943 = vadd.f32 %v941, %v942
      %s944 = scalar_lea.vmem %s276, 16
      %945 = vst [vmem:[%s944] sm:$0xff] %v943
      %s946 = scalar_lea.vmem %s270, 16
      %v947 = vld [vmem:[%s946] sm:$0xff]
      %v948 = vadd.f32 %v943, %v947
      %s949 = scalar_lea.vmem %s264, 72
      %v950 = vld [vmem:[%s949] sm:$0xff]
      %v951 = vld [vmem:[%s949 + $0x8] sm:$0xff]
      %v952 = vld [vmem:[%s949 + $0x10] sm:$0xff]
      %v953 = vld [vmem:[%s3] sm:$0xff]
      %v954 = vld [vmem:[%s3 + $0x8] sm:$0xff]
      %v955 = vld [vmem:[%s3 + $0x10] sm:$0xff]
      %v956 = vld [vmem:[%s3 + $0x18] sm:$0xff]
      %v957 = vld [vmem:[%s3 + $0x20] sm:$0xff]
      %v958 = vld [vmem:[%s3 + $0x28] sm:$0xff]
      %v959 = vld [vmem:[%s3 + $0x30] sm:$0xff]
      %v960 = vld [vmem:[%s3 + $0x38] sm:$0xff]
      %v961 = vld [vmem:[%s3 + $0x40] sm:$0xff]
      %v962 = vld [vmem:[%s3 + $0x48] sm:$0xff]
      %v963 = vld [vmem:[%s3 + $0x50] sm:$0xff]
      %v964 = vld [vmem:[%s3 + $0x58] sm:$0xff]
      %v965 = vld [vmem:[%s3 + $0x60] sm:$0xff]
      %v966 = vld [vmem:[%s3 + $0x68] sm:$0xff]
      %v967 = vld [vmem:[%s3 + $0x70] sm:$0xff]
      %v968 = vld [vmem:[%s3 + $0x78] sm:$0xff]
      %v969 = vld [vmem:[%s3 + $0x80] sm:$0xff]
      %v970 = vld [vmem:[%s3 + $0x88] sm:$0xff]
      %v971 = vld [vmem:[%s3 + $0x90] sm:$0xff]
      %v972 = vld [vmem:[%s3 + $0x98] sm:$0xff]
      %v973 = vld [vmem:[%s3 + $0xa0] sm:$0xff]
      %v974 = vld [vmem:[%s3 + $0xa8] sm:$0xff]
      %v975 = vld [vmem:[%s3 + $0xb0] sm:$0xff]
      %v976 = vld [vmem:[%s3 + $0xb8] sm:$0xff]
      %v977 = vld [vmem:[%s3 + $0xc0] sm:$0xff]
      %v978 = vld [vmem:[%s3 + $0xc8] sm:$0xff]
      %v979 = vld [vmem:[%s3 + $0xd0] sm:$0xff]
      %v980 = vld [vmem:[%s3 + $0xd8] sm:$0xff]
      %v981 = vld [vmem:[%s3 + $0xe0] sm:$0xff]
      %v982 = vld [vmem:[%s3 + $0xe8] sm:$0xff]
      %v983 = vld [vmem:[%s3 + $0xf0] sm:$0xff]
      %v984 = vld [vmem:[%s3 + $0xf8] sm:$0xff]
      %v985 = vld [vmem:[%s3 + $0x100] sm:$0xff]
      %v986 = vld [vmem:[%s3 + $0x108] sm:$0xff]
      %v987 = vld [vmem:[%s3 + $0x110] sm:$0xff]
      %v988 = vld [vmem:[%s3 + $0x118] sm:$0xff]
      %v989 = vld [vmem:[%s3 + $0x120] sm:$0xff]
      %v990 = vld [vmem:[%s3 + $0x128] sm:$0xff]
      %v991 = vld [vmem:[%s3 + $0x130] sm:$0xff]
      %v992 = vld [vmem:[%s3 + $0x138] sm:$0xff]
      %v993 = vld [vmem:[%s3 + $0x140] sm:$0xff]
      %v994 = vld [vmem:[%s3 + $0x148] sm:$0xff]
      %v995 = vld [vmem:[%s3 + $0x150] sm:$0xff]
      %v996 = vld [vmem:[%s3 + $0x158] sm:$0xff]
      %v997 = vld [vmem:[%s3 + $0x160] sm:$0xff]
      %v998 = vld [vmem:[%s3 + $0x168] sm:$0xff]
      %v999 = vld [vmem:[%s3 + $0x170] sm:$0xff]
      %v1000 = vld [vmem:[%s3 + $0x178] sm:$0xff]
      %1001 = vmatprep.subr.mxu0 %v999
      %1002 = vmatpush1.msra.mxu0 %v998
      %1003 = vmatprep.subr.mxu0 %v996
      %1004 = vmatpush1.msra.mxu0 %v995
      %1005 = vmatprep.subr.mxu0 %v993
      %1006 = vmatpush1.msra.mxu0 %v992
      %1007 = vmatprep.subr.mxu0 %v990
      %1008 = vmatpush1.msra.mxu0 %v989
      %1009 = vmatprep.subr.mxu0 %v987
      %1010 = vmatpush1.msra.mxu0 %v986
      %1011 = vmatprep.subr.mxu0 %v984
      %1012 = vmatpush1.msra.mxu0 %v983
      %1013 = vmatprep.subr.mxu0 %v981
      %1014 = vmatpush1.msra.mxu0 %v980
      %1015 = vmatprep.subr.mxu0 %v978
      %1016 = vmatpush1.msra.mxu0 %v977
      %1017 = vmatprep.subr.mxu0 %v975
      %1018 = vmatpush1.msra.mxu0 %v974
      %1019 = vmatprep.subr.mxu0 %v972
      %1020 = vmatpush1.msra.mxu0 %v971
      %1021 = vmatprep.subr.mxu0 %v969
      %1022 = vmatpush1.msra.mxu0 %v968
      %1023 = vmatprep.subr.mxu0 %v966
      %1024 = vmatpush1.msra.mxu0 %v965
      %1025 = vmatprep.subr.mxu0 %v963
      %1026 = vmatpush1.msra.mxu0 %v962
      %1027 = vmatprep.subr.mxu0 %v960
      %1028 = vmatpush1.msra.mxu0 %v959
      %1029 = vmatprep.subr.mxu0 %v957
      %1030 = vmatpush1.msra.mxu0 %v956
      %1031 = vmatprep.subr.mxu0 %v954
      %1032 = vmatpush1.msra.mxu0 %v953
      %1033 = vmatprep.subr.mxu0 0.0
      %1034 = vmatpush2.msra.mxu0 0.0
      %1035 = vmatprep.subr.mxu0 0.0
      %1036 = vmatpush2.msra.mxu0 0.0
      %1037 = vmatprep.subr.mxu0 0.0
      %1038 = vmatpush2.msra.mxu0 0.0
      %1039 = vmatprep.subr.mxu0 0.0
      %1040 = vmatpush2.msra.mxu0 0.0
      %1041 = vmatprep.subr.mxu0 0.0
      %1042 = vmatpush2.msra.mxu0 0.0
      %1043 = vmatprep.subr.mxu0 0.0
      %1044 = vmatpush2.msra.mxu0 0.0
      %1045 = vmatprep.subr.mxu0 0.0
      %1046 = vmatpush2.msra.mxu0 0.0
      %1047 = vmatprep.subr.mxu0 0.0
      %1048 = vmatpush2.msra.mxu0 0.0
      %1049 = vmatprep.subr.mxu0 0.0
      %1050 = vmatpush2.msra.mxu0 0.0
      %1051 = vmatprep.subr.mxu0 0.0
      %1052 = vmatpush2.msra.mxu0 0.0
      %1053 = vmatprep.subr.mxu0 0.0
      %1054 = vmatpush2.msra.mxu0 0.0
      %1055 = vmatprep.subr.mxu0 0.0
      %1056 = vmatpush2.msra.mxu0 0.0
      %1057 = vmatprep.subr.mxu0 0.0
      %1058 = vmatpush2.msra.mxu0 0.0
      %1059 = vmatprep.subr.mxu0 0.0
      %1060 = vmatpush2.msra.mxu0 0.0
      %1061 = vmatprep.subr.mxu0 0.0
      %1062 = vmatpush2.msra.mxu0 0.0
      %1063 = vmatprep.subr.mxu0 0.0
      %1064 = vmatpush2.msra.mxu0 0.0
      %1065 = vmatprep.mubr.f32.mxu0 0.0
      %1066 = vmatmul.mubr.f32.gmra.mxu0 %v948
      %v1067 = vpop.f32.mrf.mxu0
      %v1068 = vadd.f32 0.0, %v1067
      %v1069 = vpop.f32.mrf.mxu0
      %v1070 = vadd.f32 0.0, %v1069
      %1071 = vdwg.mxu0
      %1072 = vmatprep.subr.mxu0 0.0
      %1073 = vmatpush1.msra.mxu0 %v1000
      %1074 = vmatprep.subr.mxu0 0.0
      %1075 = vmatpush1.msra.mxu0 %v997
      %1076 = vmatprep.subr.mxu0 0.0
      %1077 = vmatpush1.msra.mxu0 %v994
      %1078 = vmatprep.subr.mxu0 0.0
      %1079 = vmatpush1.msra.mxu0 %v991
      %1080 = vmatprep.subr.mxu0 0.0
      %1081 = vmatpush1.msra.mxu0 %v988
      %1082 = vmatprep.subr.mxu0 0.0
      %1083 = vmatpush1.msra.mxu0 %v985
      %1084 = vmatprep.subr.mxu0 0.0
      %1085 = vmatpush1.msra.mxu0 %v982
      %1086 = vmatprep.subr.mxu0 0.0
      %1087 = vmatpush1.msra.mxu0 %v979
      %1088 = vmatprep.subr.mxu0 0.0
      %1089 = vmatpush1.msra.mxu0 %v976
      %1090 = vmatprep.subr.mxu0 0.0
      %1091 = vmatpush1.msra.mxu0 %v973
      %1092 = vmatprep.subr.mxu0 0.0
      %1093 = vmatpush1.msra.mxu0 %v970
      %1094 = vmatprep.subr.mxu0 0.0
      %1095 = vmatpush1.msra.mxu0 %v967
      %1096 = vmatprep.subr.mxu0 0.0
      %1097 = vmatpush1.msra.mxu0 %v964
      %1098 = vmatprep.subr.mxu0 0.0
      %1099 = vmatpush1.msra.mxu0 %v961
      %1100 = vmatprep.subr.mxu0 0.0
      %1101 = vmatpush1.msra.mxu0 %v958
      %1102 = vmatprep.subr.mxu0 0.0
      %1103 = vmatpush1.msra.mxu0 %v955
      %1104 = vmatprep.subr.mxu0 0.0
      %1105 = vmatpush2.msra.mxu0 0.0
      %1106 = vmatprep.subr.mxu0 0.0
      %1107 = vmatpush2.msra.mxu0 0.0
      %1108 = vmatprep.subr.mxu0 0.0
      %1109 = vmatpush2.msra.mxu0 0.0
      %1110 = vmatprep.subr.mxu0 0.0
      %1111 = vmatpush2.msra.mxu0 0.0
      %1112 = vmatprep.subr.mxu0 0.0
      %1113 = vmatpush2.msra.mxu0 0.0
      %1114 = vmatprep.subr.mxu0 0.0
      %1115 = vmatpush2.msra.mxu0 0.0
      %1116 = vmatprep.subr.mxu0 0.0
      %1117 = vmatpush2.msra.mxu0 0.0
      %1118 = vmatprep.subr.mxu0 0.0
      %1119 = vmatpush2.msra.mxu0 0.0
      %1120 = vmatprep.subr.mxu0 0.0
      %1121 = vmatpush2.msra.mxu0 0.0
      %1122 = vmatprep.subr.mxu0 0.0
      %1123 = vmatpush2.msra.mxu0 0.0
      %1124 = vmatprep.subr.mxu0 0.0
      %1125 = vmatpush2.msra.mxu0 0.0
      %1126 = vmatprep.subr.mxu0 0.0
      %1127 = vmatpush2.msra.mxu0 0.0
      %1128 = vmatprep.subr.mxu0 0.0
      %1129 = vmatpush2.msra.mxu0 0.0
      %1130 = vmatprep.subr.mxu0 0.0
      %1131 = vmatpush2.msra.mxu0 0.0
      %1132 = vmatprep.subr.mxu0 0.0
      %1133 = vmatpush2.msra.mxu0 0.0
      %1134 = vmatprep.subr.mxu0 0.0
      %1135 = vmatpush2.msra.mxu0 0.0
      %1136 = vmatprep.mubr.f32.mxu0 0.0
      %1137 = vmatmul.mubr.f32.gmra.mxu0 %v948
      %v1138 = vpop.f32.mrf.mxu0
      %v1139 = vadd.f32 0.0, %v1138
      %v1140 = vpop.f32.mrf.mxu0
      %1141 = vdwg.mxu0
      %v1142 = vadd.f32 %v950, %v1068
      %v1143 = vxor.u32 %v1142, 2147483648
      %v1144 = vmul.f32 %v1143, 1.442695
      %v1145 = vpow.pop %v1144
      %v1146 = vadd.f32 %v1145, 1.0
      %v1147 = vrcp.pop %v1146
      %v1148 = vmul.f32 1.0, %v1147
      %v1149 = vadd.f32 %v951, %v1070
      %v1150 = vxor.u32 %v1149, 2147483648
      %v1151 = vmul.f32 %v1150, 1.442695
      %v1152 = vpow.pop %v1151
      %v1153 = vadd.f32 %v1152, 1.0
      %v1154 = vrcp.pop %v1153
      %v1155 = vmul.f32 1.0, %v1154
      %v1156 = vadd.f32 %v1139, %v289
      %v1157 = vmul.f32 %v1148, %v1156
      %v1158 = vadd.f32 %v952, %v1157
      %v1159 = vtanh.pop %v1158
      %v1160 = vsub.f32 1.0, %v1155
      %v1161 = vmul.f32 %v1160, %v1159
      %v1162 = vmul.f32 %v1155, %v948
      %v1163 = vadd.f32 %v1161, %v1162
      %s1164 = scalar_lea.vmem %s276, 24
      %1165 = vst [vmem:[%s1164] sm:$0xff] %v1163
      %s1166 = scalar_lea.vmem %s270, 24
      %v1167 = vld [vmem:[%s1166] sm:$0xff]
      %v1168 = vadd.f32 %v1163, %v1167
      %s1169 = scalar_lea.vmem %s264, 96
      %v1170 = vld [vmem:[%s1169] sm:$0xff]
      %v1171 = vld [vmem:[%s1169 + $0x8] sm:$0xff]
      %v1172 = vld [vmem:[%s1169 + $0x10] sm:$0xff]
      %v1173 = vld [vmem:[%s3] sm:$0xff]
      %v1174 = vld [vmem:[%s3 + $0x8] sm:$0xff]
      %v1175 = vld [vmem:[%s3 + $0x10] sm:$0xff]
      %v1176 = vld [vmem:[%s3 + $0x18] sm:$0xff]
      %v1177 = vld [vmem:[%s3 + $0x20] sm:$0xff]
      %v1178 = vld [vmem:[%s3 + $0x28] sm:$0xff]
      %v1179 = vld [vmem:[%s3 + $0x30] sm:$0xff]
      %v1180 = vld [vmem:[%s3 + $0x38] sm:$0xff]
      %v1181 = vld [vmem:[%s3 + $0x40] sm:$0xff]
      %v1182 = vld [vmem:[%s3 + $0x48] sm:$0xff]
      %v1183 = vld [vmem:[%s3 + $0x50] sm:$0xff]
      %v1184 = vld [vmem:[%s3 + $0x58] sm:$0xff]
      %v1185 = vld [vmem:[%s3 + $0x60] sm:$0xff]
      %v1186 = vld [vmem:[%s3 + $0x68] sm:$0xff]
      %v1187 = vld [vmem:[%s3 + $0x70] sm:$0xff]
      %v1188 = vld [vmem:[%s3 + $0x78] sm:$0xff]
      %v1189 = vld [vmem:[%s3 + $0x80] sm:$0xff]
      %v1190 = vld [vmem:[%s3 + $0x88] sm:$0xff]
      %v1191 = vld [vmem:[%s3 + $0x90] sm:$0xff]
      %v1192 = vld [vmem:[%s3 + $0x98] sm:$0xff]
      %v1193 = vld [vmem:[%s3 + $0xa0] sm:$0xff]
      %v1194 = vld [vmem:[%s3 + $0xa8] sm:$0xff]
      %v1195 = vld [vmem:[%s3 + $0xb0] sm:$0xff]
      %v1196 = vld [vmem:[%s3 + $0xb8] sm:$0xff]
      %v1197 = vld [vmem:[%s3 + $0xc0] sm:$0xff]
      %v1198 = vld [vmem:[%s3 + $0xc8] sm:$0xff]
      %v1199 = vld [vmem:[%s3 + $0xd0] sm:$0xff]
      %v1200 = vld [vmem:[%s3 + $0xd8] sm:$0xff]
      %v1201 = vld [vmem:[%s3 + $0xe0] sm:$0xff]
      %v1202 = vld [vmem:[%s3 + $0xe8] sm:$0xff]
      %v1203 = vld [vmem:[%s3 + $0xf0] sm:$0xff]
      %v1204 = vld [vmem:[%s3 + $0xf8] sm:$0xff]
      %v1205 = vld [vmem:[%s3 + $0x100] sm:$0xff]
      %v1206 = vld [vmem:[%s3 + $0x108] sm:$0xff]
      %v1207 = vld [vmem:[%s3 + $0x110] sm:$0xff]
      %v1208 = vld [vmem:[%s3 + $0x118] sm:$0xff]
      %v1209 = vld [vmem:[%s3 + $0x120] sm:$0xff]
      %v1210 = vld [vmem:[%s3 + $0x128] sm:$0xff]
      %v1211 = vld [vmem:[%s3 + $0x130] sm:$0xff]
      %v1212 = vld [vmem:[%s3 + $0x138] sm:$0xff]
      %v1213 = vld [vmem:[%s3 + $0x140] sm:$0xff]
      %v1214 = vld [vmem:[%s3 + $0x148] sm:$0xff]
      %v1215 = vld [vmem:[%s3 + $0x150] sm:$0xff]
      %v1216 = vld [vmem:[%s3 + $0x158] sm:$0xff]
      %v1217 = vld [vmem:[%s3 + $0x160] sm:$0xff]
      %v1218 = vld [vmem:[%s3 + $0x168] sm:$0xff]
      %v1219 = vld [vmem:[%s3 + $0x170] sm:$0xff]
      %v1220 = vld [vmem:[%s3 + $0x178] sm:$0xff]
      %1221 = vmatprep.subr.mxu0 %v1219
      %1222 = vmatpush1.msra.mxu0 %v1218
      %1223 = vmatprep.subr.mxu0 %v1216
      %1224 = vmatpush1.msra.mxu0 %v1215
      %1225 = vmatprep.subr.mxu0 %v1213
      %1226 = vmatpush1.msra.mxu0 %v1212
      %1227 = vmatprep.subr.mxu0 %v1210
      %1228 = vmatpush1.msra.mxu0 %v1209
      %1229 = vmatprep.subr.mxu0 %v1207
      %1230 = vmatpush1.msra.mxu0 %v1206
      %1231 = vmatprep.subr.mxu0 %v1204
      %1232 = vmatpush1.msra.mxu0 %v1203
      %1233 = vmatprep.subr.mxu0 %v1201
      %1234 = vmatpush1.msra.mxu0 %v1200
      %1235 = vmatprep.subr.mxu0 %v1198
      %1236 = vmatpush1.msra.mxu0 %v1197
      %1237 = vmatprep.subr.mxu0 %v1195
      %1238 = vmatpush1.msra.mxu0 %v1194
      %1239 = vmatprep.subr.mxu0 %v1192
      %1240 = vmatpush1.msra.mxu0 %v1191
      %1241 = vmatprep.subr.mxu0 %v1189
      %1242 = vmatpush1.msra.mxu0 %v1188
      %1243 = vmatprep.subr.mxu0 %v1186
      %1244 = vmatpush1.msra.mxu0 %v1185
      %1245 = vmatprep.subr.mxu0 %v1183
      %1246 = vmatpush1.msra.mxu0 %v1182
      %1247 = vmatprep.subr.mxu0 %v1180
      %1248 = vmatpush1.msra.mxu0 %v1179
      %1249 = vmatprep.subr.mxu0 %v1177
      %1250 = vmatpush1.msra.mxu0 %v1176
      %1251 = vmatprep.subr.mxu0 %v1174
      %1252 = vmatpush1.msra.mxu0 %v1173
      %1253 = vmatprep.subr.mxu0 0.0
      %1254 = vmatpush2.msra.mxu0 0.0
      %1255 = vmatprep.subr.mxu0 0.0
      %1256 = vmatpush2.msra.mxu0 0.0
      %1257 = vmatprep.subr.mxu0 0.0
      %1258 = vmatpush2.msra.mxu0 0.0
      %1259 = vmatprep.subr.mxu0 0.0
      %1260 = vmatpush2.msra.mxu0 0.0
      %1261 = vmatprep.subr.mxu0 0.0
      %1262 = vmatpush2.msra.mxu0 0.0
      %1263 = vmatprep.subr.mxu0 0.0
      %1264 = vmatpush2.msra.mxu0 0.0
      %1265 = vmatprep.subr.mxu0 0.0
      %1266 = vmatpush2.msra.mxu0 0.0
      %1267 = vmatprep.subr.mxu0 0.0
      %1268 = vmatpush2.msra.mxu0 0.0
      %1269 = vmatprep.subr.mxu0 0.0
      %1270 = vmatpush2.msra.mxu0 0.0
      %1271 = vmatprep.subr.mxu0 0.0
      %1272 = vmatpush2.msra.mxu0 0.0
      %1273 = vmatprep.subr.mxu0 0.0
      %1274 = vmatpush2.msra.mxu0 0.0
      %1275 = vmatprep.subr.mxu0 0.0
      %1276 = vmatpush2.msra.mxu0 0.0
      %1277 = vmatprep.subr.mxu0 0.0
      %1278 = vmatpush2.msra.mxu0 0.0
      %1279 = vmatprep.subr.mxu0 0.0
      %1280 = vmatpush2.msra.mxu0 0.0
      %1281 = vmatprep.subr.mxu0 0.0
      %1282 = vmatpush2.msra.mxu0 0.0
      %1283 = vmatprep.subr.mxu0 0.0
      %1284 = vmatpush2.msra.mxu0 0.0
      %1285 = vmatprep.mubr.f32.mxu0 0.0
      %1286 = vmatmul.mubr.f32.gmra.mxu0 %v1168
      %v1287 = vpop.f32.mrf.mxu0
      %v1288 = vadd.f32 0.0, %v1287
      %v1289 = vpop.f32.mrf.mxu0
      %v1290 = vadd.f32 0.0, %v1289
      %1291 = vdwg.mxu0
      %1292 = vmatprep.subr.mxu0 0.0
      %1293 = vmatpush1.msra.mxu0 %v1220
      %1294 = vmatprep.subr.mxu0 0.0
      %1295 = vmatpush1.msra.mxu0 %v1217
      %1296 = vmatprep.subr.mxu0 0.0
      %1297 = vmatpush1.msra.mxu0 %v1214
      %1298 = vmatprep.subr.mxu0 0.0
      %1299 = vmatpush1.msra.mxu0 %v1211
      %1300 = vmatprep.subr.mxu0 0.0
      %1301 = vmatpush1.msra.mxu0 %v1208
      %1302 = vmatprep.subr.mxu0 0.0
      %1303 = vmatpush1.msra.mxu0 %v1205
      %1304 = vmatprep.subr.mxu0 0.0
      %1305 = vmatpush1.msra.mxu0 %v1202
      %1306 = vmatprep.subr.mxu0 0.0
      %1307 = vmatpush1.msra.mxu0 %v1199
      %1308 = vmatprep.subr.mxu0 0.0
      %1309 = vmatpush1.msra.mxu0 %v1196
      %1310 = vmatprep.subr.mxu0 0.0
      %1311 = vmatpush1.msra.mxu0 %v1193
      %1312 = vmatprep.subr.mxu0 0.0
      %1313 = vmatpush1.msra.mxu0 %v1190
      %1314 = vmatprep.subr.mxu0 0.0
      %1315 = vmatpush1.msra.mxu0 %v1187
      %1316 = vmatprep.subr.mxu0 0.0
      %1317 = vmatpush1.msra.mxu0 %v1184
      %1318 = vmatprep.subr.mxu0 0.0
      %1319 = vmatpush1.msra.mxu0 %v1181
      %1320 = vmatprep.subr.mxu0 0.0
      %1321 = vmatpush1.msra.mxu0 %v1178
      %1322 = vmatprep.subr.mxu0 0.0
      %1323 = vmatpush1.msra.mxu0 %v1175
      %1324 = vmatprep.subr.mxu0 0.0
      %1325 = vmatpush2.msra.mxu0 0.0
      %1326 = vmatprep.subr.mxu0 0.0
      %1327 = vmatpush2.msra.mxu0 0.0
      %1328 = vmatprep.subr.mxu0 0.0
      %1329 = vmatpush2.msra.mxu0 0.0
      %1330 = vmatprep.subr.mxu0 0.0
      %1331 = vmatpush2.msra.mxu0 0.0
      %1332 = vmatprep.subr.mxu0 0.0
      %1333 = vmatpush2.msra.mxu0 0.0
      %1334 = vmatprep.subr.mxu0 0.0
      %1335 = vmatpush2.msra.mxu0 0.0
      %1336 = vmatprep.subr.mxu0 0.0
      %1337 = vmatpush2.msra.mxu0 0.0
      %1338 = vmatprep.subr.mxu0 0.0
      %1339 = vmatpush2.msra.mxu0 0.0
      %1340 = vmatprep.subr.mxu0 0.0
      %1341 = vmatpush2.msra.mxu0 0.0
      %1342 = vmatprep.subr.mxu0 0.0
      %1343 = vmatpush2.msra.mxu0 0.0
      %1344 = vmatprep.subr.mxu0 0.0
      %1345 = vmatpush2.msra.mxu0 0.0
      %1346 = vmatprep.subr.mxu0 0.0
      %1347 = vmatpush2.msra.mxu0 0.0
      %1348 = vmatprep.subr.mxu0 0.0
      %1349 = vmatpush2.msra.mxu0 0.0
      %1350 = vmatprep.subr.mxu0 0.0
      %1351 = vmatpush2.msra.mxu0 0.0
      %1352 = vmatprep.subr.mxu0 0.0
      %1353 = vmatpush2.msra.mxu0 0.0
      %1354 = vmatprep.subr.mxu0 0.0
      %1355 = vmatpush2.msra.mxu0 0.0
      %1356 = vmatprep.mubr.f32.mxu0 0.0
      %1357 = vmatmul.mubr.f32.gmra.mxu0 %v1168
      %v1358 = vpop.f32.mrf.mxu0
      %v1359 = vadd.f32 0.0, %v1358
      %v1360 = vpop.f32.mrf.mxu0
      %1361 = vdwg.mxu0
      %v1362 = vadd.f32 %v1170, %v1288
      %v1363 = vxor.u32 %v1362, 2147483648
      %v1364 = vmul.f32 %v1363, 1.442695
      %v1365 = vpow.pop %v1364
      %v1366 = vadd.f32 %v1365, 1.0
      %v1367 = vrcp.pop %v1366
      %v1368 = vmul.f32 1.0, %v1367
      %v1369 = vadd.f32 %v1171, %v1290
      %v1370 = vxor.u32 %v1369, 2147483648
      %v1371 = vmul.f32 %v1370, 1.442695
      %v1372 = vpow.pop %v1371
      %v1373 = vadd.f32 %v1372, 1.0
      %v1374 = vrcp.pop %v1373
      %v1375 = vmul.f32 1.0, %v1374
      %v1376 = vadd.f32 %v1359, %v289
      %v1377 = vmul.f32 %v1368, %v1376
      %v1378 = vadd.f32 %v1172, %v1377
      %v1379 = vtanh.pop %v1378
      %v1380 = vsub.f32 1.0, %v1375
      %v1381 = vmul.f32 %v1380, %v1379
      %v1382 = vmul.f32 %v1375, %v1168
      %v1383 = vadd.f32 %v1381, %v1382
      %s1384 = scalar_lea.vmem %s276, 32
      %1385 = vst [vmem:[%s1384] sm:$0xff] %v1383
      %s1386 = scalar_lea.vmem %s270, 32
      %v1387 = vld [vmem:[%s1386] sm:$0xff]
      %v1388 = vadd.f32 %v1383, %v1387
      %s1389 = scalar_lea.vmem %s264, 120
      %v1390 = vld [vmem:[%s1389] sm:$0xff]
      %v1391 = vld [vmem:[%s1389 + $0x8] sm:$0xff]
      %v1392 = vld [vmem:[%s1389 + $0x10] sm:$0xff]
      %v1393 = vld [vmem:[%s3] sm:$0xff]
      %v1394 = vld [vmem:[%s3 + $0x8] sm:$0xff]
      %v1395 = vld [vmem:[%s3 + $0x10] sm:$0xff]
      %v1396 = vld [vmem:[%s3 + $0x18] sm:$0xff]
      %v1397 = vld [vmem:[%s3 + $0x20] sm:$0xff]
      %v1398 = vld [vmem:[%s3 + $0x28] sm:$0xff]
      %v1399 = vld [vmem:[%s3 + $0x30] sm:$0xff]
      %v1400 = vld [vmem:[%s3 + $0x38] sm:$0xff]
      %v1401 = vld [vmem:[%s3 + $0x40] sm:$0xff]
      %v1402 = vld [vmem:[%s3 + $0x48] sm:$0xff]
      %v1403 = vld [vmem:[%s3 + $0x50] sm:$0xff]
      %v1404 = vld [vmem:[%s3 + $0x58] sm:$0xff]
      %v1405 = vld [vmem:[%s3 + $0x60] sm:$0xff]
      %v1406 = vld [vmem:[%s3 + $0x68] sm:$0xff]
      %v1407 = vld [vmem:[%s3 + $0x70] sm:$0xff]
      %v1408 = vld [vmem:[%s3 + $0x78] sm:$0xff]
      %v1409 = vld [vmem:[%s3 + $0x80] sm:$0xff]
      %v1410 = vld [vmem:[%s3 + $0x88] sm:$0xff]
      %v1411 = vld [vmem:[%s3 + $0x90] sm:$0xff]
      %v1412 = vld [vmem:[%s3 + $0x98] sm:$0xff]
      %v1413 = vld [vmem:[%s3 + $0xa0] sm:$0xff]
      %v1414 = vld [vmem:[%s3 + $0xa8] sm:$0xff]
      %v1415 = vld [vmem:[%s3 + $0xb0] sm:$0xff]
      %v1416 = vld [vmem:[%s3 + $0xb8] sm:$0xff]
      %v1417 = vld [vmem:[%s3 + $0xc0] sm:$0xff]
      %v1418 = vld [vmem:[%s3 + $0xc8] sm:$0xff]
      %v1419 = vld [vmem:[%s3 + $0xd0] sm:$0xff]
      %v1420 = vld [vmem:[%s3 + $0xd8] sm:$0xff]
      %v1421 = vld [vmem:[%s3 + $0xe0] sm:$0xff]
      %v1422 = vld [vmem:[%s3 + $0xe8] sm:$0xff]
      %v1423 = vld [vmem:[%s3 + $0xf0] sm:$0xff]
      %v1424 = vld [vmem:[%s3 + $0xf8] sm:$0xff]
      %v1425 = vld [vmem:[%s3 + $0x100] sm:$0xff]
      %v1426 = vld [vmem:[%s3 + $0x108] sm:$0xff]
      %v1427 = vld [vmem:[%s3 + $0x110] sm:$0xff]
      %v1428 = vld [vmem:[%s3 + $0x118] sm:$0xff]
      %v1429 = vld [vmem:[%s3 + $0x120] sm:$0xff]
      %v1430 = vld [vmem:[%s3 + $0x128] sm:$0xff]
      %v1431 = vld [vmem:[%s3 + $0x130] sm:$0xff]
      %v1432 = vld [vmem:[%s3 + $0x138] sm:$0xff]
      %v1433 = vld [vmem:[%s3 + $0x140] sm:$0xff]
      %v1434 = vld [vmem:[%s3 + $0x148] sm:$0xff]
      %v1435 = vld [vmem:[%s3 + $0x150] sm:$0xff]
      %v1436 = vld [vmem:[%s3 + $0x158] sm:$0xff]
      %v1437 = vld [vmem:[%s3 + $0x160] sm:$0xff]
      %v1438 = vld [vmem:[%s3 + $0x168] sm:$0xff]
      %v1439 = vld [vmem:[%s3 + $0x170] sm:$0xff]
      %v1440 = vld [vmem:[%s3 + $0x178] sm:$0xff]
      %1441 = vmatprep.subr.mxu0 %v1439
      %1442 = vmatpush1.msra.mxu0 %v1438
      %1443 = vmatprep.subr.mxu0 %v1436
      %1444 = vmatpush1.msra.mxu0 %v1435
      %1445 = vmatprep.subr.mxu0 %v1433
      %1446 = vmatpush1.msra.mxu0 %v1432
      %1447 = vmatprep.subr.mxu0 %v1430
      %1448 = vmatpush1.msra.mxu0 %v1429
      %1449 = vmatprep.subr.mxu0 %v1427
      %1450 = vmatpush1.msra.mxu0 %v1426
      %1451 = vmatprep.subr.mxu0 %v1424
      %1452 = vmatpush1.msra.mxu0 %v1423
      %1453 = vmatprep.subr.mxu0 %v1421
      %1454 = vmatpush1.msra.mxu0 %v1420
      %1455 = vmatprep.subr.mxu0 %v1418
      %1456 = vmatpush1.msra.mxu0 %v1417
      %1457 = vmatprep.subr.mxu0 %v1415
      %1458 = vmatpush1.msra.mxu0 %v1414
      %1459 = vmatprep.subr.mxu0 %v1412
      %1460 = vmatpush1.msra.mxu0 %v1411
      %1461 = vmatprep.subr.mxu0 %v1409
      %1462 = vmatpush1.msra.mxu0 %v1408
      %1463 = vmatprep.subr.mxu0 %v1406
      %1464 = vmatpush1.msra.mxu0 %v1405
      %1465 = vmatprep.subr.mxu0 %v1403
      %1466 = vmatpush1.msra.mxu0 %v1402
      %1467 = vmatprep.subr.mxu0 %v1400
      %1468 = vmatpush1.msra.mxu0 %v1399
      %1469 = vmatprep.subr.mxu0 %v1397
      %1470 = vmatpush1.msra.mxu0 %v1396
      %1471 = vmatprep.subr.mxu0 %v1394
      %1472 = vmatpush1.msra.mxu0 %v1393
      %1473 = vmatprep.subr.mxu0 0.0
      %1474 = vmatpush2.msra.mxu0 0.0
      %1475 = vmatprep.subr.mxu0 0.0
      %1476 = vmatpush2.msra.mxu0 0.0
      %1477 = vmatprep.subr.mxu0 0.0
      %1478 = vmatpush2.msra.mxu0 0.0
      %1479 = vmatprep.subr.mxu0 0.0
      %1480 = vmatpush2.msra.mxu0 0.0
      %1481 = vmatprep.subr.mxu0 0.0
      %1482 = vmatpush2.msra.mxu0 0.0
      %1483 = vmatprep.subr.mxu0 0.0
      %1484 = vmatpush2.msra.mxu0 0.0
      %1485 = vmatprep.subr.mxu0 0.0
      %1486 = vmatpush2.msra.mxu0 0.0
      %1487 = vmatprep.subr.mxu0 0.0
      %1488 = vmatpush2.msra.mxu0 0.0
      %1489 = vmatprep.subr.mxu0 0.0
      %1490 = vmatpush2.msra.mxu0 0.0
      %1491 = vmatprep.subr.mxu0 0.0
      %1492 = vmatpush2.msra.mxu0 0.0
      %1493 = vmatprep.subr.mxu0 0.0
      %1494 = vmatpush2.msra.mxu0 0.0
      %1495 = vmatprep.subr.mxu0 0.0
      %1496 = vmatpush2.msra.mxu0 0.0
      %1497 = vmatprep.subr.mxu0 0.0
      %1498 = vmatpush2.msra.mxu0 0.0
      %1499 = vmatprep.subr.mxu0 0.0
      %1500 = vmatpush2.msra.mxu0 0.0
      %1501 = vmatprep.subr.mxu0 0.0
      %1502 = vmatpush2.msra.mxu0 0.0
      %1503 = vmatprep.subr.mxu0 0.0
      %1504 = vmatpush2.msra.mxu0 0.0
      %1505 = vmatprep.mubr.f32.mxu0 0.0
      %1506 = vmatmul.mubr.f32.gmra.mxu0 %v1388
      %v1507 = vpop.f32.mrf.mxu0
      %v1508 = vadd.f32 0.0, %v1507
      %v1509 = vpop.f32.mrf.mxu0
      %v1510 = vadd.f32 0.0, %v1509
      %1511 = vdwg.mxu0
      %1512 = vmatprep.subr.mxu0 0.0
      %1513 = vmatpush1.msra.mxu0 %v1440
      %1514 = vmatprep.subr.mxu0 0.0
      %1515 = vmatpush1.msra.mxu0 %v1437
      %1516 = vmatprep.subr.mxu0 0.0
      %1517 = vmatpush1.msra.mxu0 %v1434
      %1518 = vmatprep.subr.mxu0 0.0
      %1519 = vmatpush1.msra.mxu0 %v1431
      %1520 = vmatprep.subr.mxu0 0.0
      %1521 = vmatpush1.msra.mxu0 %v1428
      %1522 = vmatprep.subr.mxu0 0.0
      %1523 = vmatpush1.msra.mxu0 %v1425
      %1524 = vmatprep.subr.mxu0 0.0
      %1525 = vmatpush1.msra.mxu0 %v1422
      %1526 = vmatprep.subr.mxu0 0.0
      %1527 = vmatpush1.msra.mxu0 %v1419
      %1528 = vmatprep.subr.mxu0 0.0
      %1529 = vmatpush1.msra.mxu0 %v1416
      %1530 = vmatprep.subr.mxu0 0.0
      %1531 = vmatpush1.msra.mxu0 %v1413
      %1532 = vmatprep.subr.mxu0 0.0
      %1533 = vmatpush1.msra.mxu0 %v1410
      %1534 = vmatprep.subr.mxu0 0.0
      %1535 = vmatpush1.msra.mxu0 %v1407
      %1536 = vmatprep.subr.mxu0 0.0
      %1537 = vmatpush1.msra.mxu0 %v1404
      %1538 = vmatprep.subr.mxu0 0.0
      %1539 = vmatpush1.msra.mxu0 %v1401
      %1540 = vmatprep.subr.mxu0 0.0
      %1541 = vmatpush1.msra.mxu0 %v1398
      %1542 = vmatprep.subr.mxu0 0.0
      %1543 = vmatpush1.msra.mxu0 %v1395
      %1544 = vmatprep.subr.mxu0 0.0
      %1545 = vmatpush2.msra.mxu0 0.0
      %1546 = vmatprep.subr.mxu0 0.0
      %1547 = vmatpush2.msra.mxu0 0.0
      %1548 = vmatprep.subr.mxu0 0.0
      %1549 = vmatpush2.msra.mxu0 0.0
      %1550 = vmatprep.subr.mxu0 0.0
      %1551 = vmatpush2.msra.mxu0 0.0
      %1552 = vmatprep.subr.mxu0 0.0
      %1553 = vmatpush2.msra.mxu0 0.0
      %1554 = vmatprep.subr.mxu0 0.0
      %1555 = vmatpush2.msra.mxu0 0.0
      %1556 = vmatprep.subr.mxu0 0.0
      %1557 = vmatpush2.msra.mxu0 0.0
      %1558 = vmatprep.subr.mxu0 0.0
      %1559 = vmatpush2.msra.mxu0 0.0
      %1560 = vmatprep.subr.mxu0 0.0
      %1561 = vmatpush2.msra.mxu0 0.0
      %1562 = vmatprep.subr.mxu0 0.0
      %1563 = vmatpush2.msra.mxu0 0.0
      %1564 = vmatprep.subr.mxu0 0.0
      %1565 = vmatpush2.msra.mxu0 0.0
      %1566 = vmatprep.subr.mxu0 0.0
      %1567 = vmatpush2.msra.mxu0 0.0
      %1568 = vmatprep.subr.mxu0 0.0
      %1569 = vmatpush2.msra.mxu0 0.0
      %1570 = vmatprep.subr.mxu0 0.0
      %1571 = vmatpush2.msra.mxu0 0.0
      %1572 = vmatprep.subr.mxu0 0.0
      %1573 = vmatpush2.msra.mxu0 0.0
      %1574 = vmatprep.subr.mxu0 0.0
      %1575 = vmatpush2.msra.mxu0 0.0
      %1576 = vmatprep.mubr.f32.mxu0 0.0
      %1577 = vmatmul.mubr.f32.gmra.mxu0 %v1388
      %v1578 = vpop.f32.mrf.mxu0
      %v1579 = vadd.f32 0.0, %v1578
      %v1580 = vpop.f32.mrf.mxu0
      %1581 = vdwg.mxu0
      %v1582 = vadd.f32 %v1390, %v1508
      %v1583 = vxor.u32 %v1582, 2147483648
      %v1584 = vmul.f32 %v1583, 1.442695
      %v1585 = vpow.pop %v1584
      %v1586 = vadd.f32 %v1585, 1.0
      %v1587 = vrcp.pop %v1586
      %v1588 = vmul.f32 1.0, %v1587
      %v1589 = vadd.f32 %v1391, %v1510
      %v1590 = vxor.u32 %v1589, 2147483648
      %v1591 = vmul.f32 %v1590, 1.442695
      %v1592 = vpow.pop %v1591
      %v1593 = vadd.f32 %v1592, 1.0
      %v1594 = vrcp.pop %v1593
      %v1595 = vmul.f32 1.0, %v1594
      %v1596 = vadd.f32 %v1579, %v289
      %v1597 = vmul.f32 %v1588, %v1596
      %v1598 = vadd.f32 %v1392, %v1597
      %v1599 = vtanh.pop %v1598
      %v1600 = vsub.f32 1.0, %v1595
      %v1601 = vmul.f32 %v1600, %v1599
      %v1602 = vmul.f32 %v1595, %v1388
      %v1603 = vadd.f32 %v1601, %v1602
      %s1604 = scalar_lea.vmem %s276, 40
      %1605 = vst [vmem:[%s1604] sm:$0xff] %v1603
      %s1606 = scalar_lea.vmem %s270, 40
      %v1607 = vld [vmem:[%s1606] sm:$0xff]
      %v1608 = vadd.f32 %v1603, %v1607
      %s1609 = scalar_lea.vmem %s264, 144
      %v1610 = vld [vmem:[%s1609] sm:$0xff]
      %v1611 = vld [vmem:[%s1609 + $0x8] sm:$0xff]
      %v1612 = vld [vmem:[%s1609 + $0x10] sm:$0xff]
      %v1613 = vld [vmem:[%s3] sm:$0xff]
      %v1614 = vld [vmem:[%s3 + $0x8] sm:$0xff]
      %v1615 = vld [vmem:[%s3 + $0x10] sm:$0xff]
      %v1616 = vld [vmem:[%s3 + $0x18] sm:$0xff]
      %v1617 = vld [vmem:[%s3 + $0x20] sm:$0xff]
      %v1618 = vld [vmem:[%s3 + $0x28] sm:$0xff]
      %v1619 = vld [vmem:[%s3 + $0x30] sm:$0xff]
      %v1620 = vld [vmem:[%s3 + $0x38] sm:$0xff]
      %v1621 = vld [vmem:[%s3 + $0x40] sm:$0xff]
      %v1622 = vld [vmem:[%s3 + $0x48] sm:$0xff]
      %v1623 = vld [vmem:[%s3 + $0x50] sm:$0xff]
      %v1624 = vld [vmem:[%s3 + $0x58] sm:$0xff]
      %v1625 = vld [vmem:[%s3 + $0x60] sm:$0xff]
      %v1626 = vld [vmem:[%s3 + $0x68] sm:$0xff]
      %v1627 = vld [vmem:[%s3 + $0x70] sm:$0xff]
      %v1628 = vld [vmem:[%s3 + $0x78] sm:$0xff]
      %v1629 = vld [vmem:[%s3 + $0x80] sm:$0xff]
      %v1630 = vld [vmem:[%s3 + $0x88] sm:$0xff]
      %v1631 = vld [vmem:[%s3 + $0x90] sm:$0xff]
      %v1632 = vld [vmem:[%s3 + $0x98] sm:$0xff]
      %v1633 = vld [vmem:[%s3 + $0xa0] sm:$0xff]
      %v1634 = vld [vmem:[%s3 + $0xa8] sm:$0xff]
      %v1635 = vld [vmem:[%s3 + $0xb0] sm:$0xff]
      %v1636 = vld [vmem:[%s3 + $0xb8] sm:$0xff]
      %v1637 = vld [vmem:[%s3 + $0xc0] sm:$0xff]
      %v1638 = vld [vmem:[%s3 + $0xc8] sm:$0xff]
      %v1639 = vld [vmem:[%s3 + $0xd0] sm:$0xff]
      %v1640 = vld [vmem:[%s3 + $0xd8] sm:$0xff]
      %v1641 = vld [vmem:[%s3 + $0xe0] sm:$0xff]
      %v1642 = vld [vmem:[%s3 + $0xe8] sm:$0xff]
      %v1643 = vld [vmem:[%s3 + $0xf0] sm:$0xff]
      %v1644 = vld [vmem:[%s3 + $0xf8] sm:$0xff]
      %v1645 = vld [vmem:[%s3 + $0x100] sm:$0xff]
      %v1646 = vld [vmem:[%s3 + $0x108] sm:$0xff]
      %v1647 = vld [vmem:[%s3 + $0x110] sm:$0xff]
      %v1648 = vld [vmem:[%s3 + $0x118] sm:$0xff]
      %v1649 = vld [vmem:[%s3 + $0x120] sm:$0xff]
      %v1650 = vld [vmem:[%s3 + $0x128] sm:$0xff]
      %v1651 = vld [vmem:[%s3 + $0x130] sm:$0xff]
      %v1652 = vld [vmem:[%s3 + $0x138] sm:$0xff]
      %v1653 = vld [vmem:[%s3 + $0x140] sm:$0xff]
      %v1654 = vld [vmem:[%s3 + $0x148] sm:$0xff]
      %v1655 = vld [vmem:[%s3 + $0x150] sm:$0xff]
      %v1656 = vld [vmem:[%s3 + $0x158] sm:$0xff]
      %v1657 = vld [vmem:[%s3 + $0x160] sm:$0xff]
      %v1658 = vld [vmem:[%s3 + $0x168] sm:$0xff]
      %v1659 = vld [vmem:[%s3 + $0x170] sm:$0xff]
      %v1660 = vld [vmem:[%s3 + $0x178] sm:$0xff]
      %1661 = vmatprep.subr.mxu0 %v1659
      %1662 = vmatpush1.msra.mxu0 %v1658
      %1663 = vmatprep.subr.mxu0 %v1656
      %1664 = vmatpush1.msra.mxu0 %v1655
      %1665 = vmatprep.subr.mxu0 %v1653
      %1666 = vmatpush1.msra.mxu0 %v1652
      %1667 = vmatprep.subr.mxu0 %v1650
      %1668 = vmatpush1.msra.mxu0 %v1649
      %1669 = vmatprep.subr.mxu0 %v1647
      %1670 = vmatpush1.msra.mxu0 %v1646
      %1671 = vmatprep.subr.mxu0 %v1644
      %1672 = vmatpush1.msra.mxu0 %v1643
      %1673 = vmatprep.subr.mxu0 %v1641
      %1674 = vmatpush1.msra.mxu0 %v1640
      %1675 = vmatprep.subr.mxu0 %v1638
      %1676 = vmatpush1.msra.mxu0 %v1637
      %1677 = vmatprep.subr.mxu0 %v1635
      %1678 = vmatpush1.msra.mxu0 %v1634
      %1679 = vmatprep.subr.mxu0 %v1632
      %1680 = vmatpush1.msra.mxu0 %v1631
      %1681 = vmatprep.subr.mxu0 %v1629
      %1682 = vmatpush1.msra.mxu0 %v1628
      %1683 = vmatprep.subr.mxu0 %v1626
      %1684 = vmatpush1.msra.mxu0 %v1625
      %1685 = vmatprep.subr.mxu0 %v1623
      %1686 = vmatpush1.msra.mxu0 %v1622
      %1687 = vmatprep.subr.mxu0 %v1620
      %1688 = vmatpush1.msra.mxu0 %v1619
      %1689 = vmatprep.subr.mxu0 %v1617
      %1690 = vmatpush1.msra.mxu0 %v1616
      %1691 = vmatprep.subr.mxu0 %v1614
      %1692 = vmatpush1.msra.mxu0 %v1613
      %1693 = vmatprep.subr.mxu0 0.0
      %1694 = vmatpush2.msra.mxu0 0.0
      %1695 = vmatprep.subr.mxu0 0.0
      %1696 = vmatpush2.msra.mxu0 0.0
      %1697 = vmatprep.subr.mxu0 0.0
      %1698 = vmatpush2.msra.mxu0 0.0
      %1699 = vmatprep.subr.mxu0 0.0
      %1700 = vmatpush2.msra.mxu0 0.0
      %1701 = vmatprep.subr.mxu0 0.0
      %1702 = vmatpush2.msra.mxu0 0.0
      %1703 = vmatprep.subr.mxu0 0.0
      %1704 = vmatpush2.msra.mxu0 0.0
      %1705 = vmatprep.subr.mxu0 0.0
      %1706 = vmatpush2.msra.mxu0 0.0
      %1707 = vmatprep.subr.mxu0 0.0
      %1708 = vmatpush2.msra.mxu0 0.0
      %1709 = vmatprep.subr.mxu0 0.0
      %1710 = vmatpush2.msra.mxu0 0.0
      %1711 = vmatprep.subr.mxu0 0.0
      %1712 = vmatpush2.msra.mxu0 0.0
      %1713 = vmatprep.subr.mxu0 0.0
      %1714 = vmatpush2.msra.mxu0 0.0
      %1715 = vmatprep.subr.mxu0 0.0
      %1716 = vmatpush2.msra.mxu0 0.0
      %1717 = vmatprep.subr.mxu0 0.0
      %1718 = vmatpush2.msra.mxu0 0.0
      %1719 = vmatprep.subr.mxu0 0.0
      %1720 = vmatpush2.msra.mxu0 0.0
      %1721 = vmatprep.subr.mxu0 0.0
      %1722 = vmatpush2.msra.mxu0 0.0
      %1723 = vmatprep.subr.mxu0 0.0
      %1724 = vmatpush2.msra.mxu0 0.0
      %1725 = vmatprep.mubr.f32.mxu0 0.0
      %1726 = vmatmul.mubr.f32.gmra.mxu0 %v1608
      %v1727 = vpop.f32.mrf.mxu0
      %v1728 = vadd.f32 0.0, %v1727
      %v1729 = vpop.f32.mrf.mxu0
      %v1730 = vadd.f32 0.0, %v1729
      %1731 = vdwg.mxu0
      %1732 = vmatprep.subr.mxu0 0.0
      %1733 = vmatpush1.msra.mxu0 %v1660
      %1734 = vmatprep.subr.mxu0 0.0
      %1735 = vmatpush1.msra.mxu0 %v1657
      %1736 = vmatprep.subr.mxu0 0.0
      %1737 = vmatpush1.msra.mxu0 %v1654
      %1738 = vmatprep.subr.mxu0 0.0
      %1739 = vmatpush1.msra.mxu0 %v1651
      %1740 = vmatprep.subr.mxu0 0.0
      %1741 = vmatpush1.msra.mxu0 %v1648
      %1742 = vmatprep.subr.mxu0 0.0
      %1743 = vmatpush1.msra.mxu0 %v1645
      %1744 = vmatprep.subr.mxu0 0.0
      %1745 = vmatpush1.msra.mxu0 %v1642
      %1746 = vmatprep.subr.mxu0 0.0
      %1747 = vmatpush1.msra.mxu0 %v1639
      %1748 = vmatprep.subr.mxu0 0.0
      %1749 = vmatpush1.msra.mxu0 %v1636
      %1750 = vmatprep.subr.mxu0 0.0
      %1751 = vmatpush1.msra.mxu0 %v1633
      %1752 = vmatprep.subr.mxu0 0.0
      %1753 = vmatpush1.msra.mxu0 %v1630
      %1754 = vmatprep.subr.mxu0 0.0
      %1755 = vmatpush1.msra.mxu0 %v1627
      %1756 = vmatprep.subr.mxu0 0.0
      %1757 = vmatpush1.msra.mxu0 %v1624
      %1758 = vmatprep.subr.mxu0 0.0
      %1759 = vmatpush1.msra.mxu0 %v1621
      %1760 = vmatprep.subr.mxu0 0.0
      %1761 = vmatpush1.msra.mxu0 %v1618
      %1762 = vmatprep.subr.mxu0 0.0
      %1763 = vmatpush1.msra.mxu0 %v1615
      %1764 = vmatprep.subr.mxu0 0.0
      %1765 = vmatpush2.msra.mxu0 0.0
      %1766 = vmatprep.subr.mxu0 0.0
      %1767 = vmatpush2.msra.mxu0 0.0
      %1768 = vmatprep.subr.mxu0 0.0
      %1769 = vmatpush2.msra.mxu0 0.0
      %1770 = vmatprep.subr.mxu0 0.0
      %1771 = vmatpush2.msra.mxu0 0.0
      %1772 = vmatprep.subr.mxu0 0.0
      %1773 = vmatpush2.msra.mxu0 0.0
      %1774 = vmatprep.subr.mxu0 0.0
      %1775 = vmatpush2.msra.mxu0 0.0
      %1776 = vmatprep.subr.mxu0 0.0
      %1777 = vmatpush2.msra.mxu0 0.0
      %1778 = vmatprep.subr.mxu0 0.0
      %1779 = vmatpush2.msra.mxu0 0.0
      %1780 = vmatprep.subr.mxu0 0.0
      %1781 = vmatpush2.msra.mxu0 0.0
      %1782 = vmatprep.subr.mxu0 0.0
      %1783 = vmatpush2.msra.mxu0 0.0
      %1784 = vmatprep.subr.mxu0 0.0
      %1785 = vmatpush2.msra.mxu0 0.0
      %1786 = vmatprep.subr.mxu0 0.0
      %1787 = vmatpush2.msra.mxu0 0.0
      %1788 = vmatprep.subr.mxu0 0.0
      %1789 = vmatpush2.msra.mxu0 0.0
      %1790 = vmatprep.subr.mxu0 0.0
      %1791 = vmatpush2.msra.mxu0 0.0
      %1792 = vmatprep.subr.mxu0 0.0
      %1793 = vmatpush2.msra.mxu0 0.0
      %1794 = vmatprep.subr.mxu0 0.0
      %1795 = vmatpush2.msra.mxu0 0.0
      %1796 = vmatprep.mubr.f32.mxu0 0.0
      %1797 = vmatmul.mubr.f32.gmra.mxu0 %v1608
      %v1798 = vpop.f32.mrf.mxu0
      %v1799 = vadd.f32 0.0, %v1798
      %v1800 = vpop.f32.mrf.mxu0
      %1801 = vdwg.mxu0
      %v1802 = vadd.f32 %v1610, %v1728
      %v1803 = vxor.u32 %v1802, 2147483648
      %v1804 = vmul.f32 %v1803, 1.442695
      %v1805 = vpow.pop %v1804
      %v1806 = vadd.f32 %v1805, 1.0
      %v1807 = vrcp.pop %v1806
      %v1808 = vmul.f32 1.0, %v1807
      %v1809 = vadd.f32 %v1611, %v1730
      %v1810 = vxor.u32 %v1809, 2147483648
      %v1811 = vmul.f32 %v1810, 1.442695
      %v1812 = vpow.pop %v1811
      %v1813 = vadd.f32 %v1812, 1.0
      %v1814 = vrcp.pop %v1813
      %v1815 = vmul.f32 1.0, %v1814
      %v1816 = vadd.f32 %v1799, %v289
      %v1817 = vmul.f32 %v1808, %v1816
      %v1818 = vadd.f32 %v1612, %v1817
      %v1819 = vtanh.pop %v1818
      %v1820 = vsub.f32 1.0, %v1815
      %v1821 = vmul.f32 %v1820, %v1819
      %v1822 = vmul.f32 %v1815, %v1608
      %v1823 = vadd.f32 %v1821, %v1822
      %s1824 = scalar_lea.vmem %s276, 48
      %1825 = vst [vmem:[%s1824] sm:$0xff] %v1823
      %s1826 = scalar_lea.vmem %s270, 48
      %v1827 = vld [vmem:[%s1826] sm:$0xff]
      %v1828 = vadd.f32 %v1823, %v1827
      %s1829 = scalar_lea.vmem %s264, 168
      %v1830 = vld [vmem:[%s1829] sm:$0xff]
      %v1831 = vld [vmem:[%s1829 + $0x8] sm:$0xff]
      %v1832 = vld [vmem:[%s1829 + $0x10] sm:$0xff]
      %v1833 = vld [vmem:[%s3] sm:$0xff]
      %v1834 = vld [vmem:[%s3 + $0x8] sm:$0xff]
      %v1835 = vld [vmem:[%s3 + $0x10] sm:$0xff]
      %v1836 = vld [vmem:[%s3 + $0x18] sm:$0xff]
      %v1837 = vld [vmem:[%s3 + $0x20] sm:$0xff]
      %v1838 = vld [vmem:[%s3 + $0x28] sm:$0xff]
      %v1839 = vld [vmem:[%s3 + $0x30] sm:$0xff]
      %v1840 = vld [vmem:[%s3 + $0x38] sm:$0xff]
      %v1841 = vld [vmem:[%s3 + $0x40] sm:$0xff]
      %v1842 = vld [vmem:[%s3 + $0x48] sm:$0xff]
      %v1843 = vld [vmem:[%s3 + $0x50] sm:$0xff]
      %v1844 = vld [vmem:[%s3 + $0x58] sm:$0xff]
      %v1845 = vld [vmem:[%s3 + $0x60] sm:$0xff]
      %v1846 = vld [vmem:[%s3 + $0x68] sm:$0xff]
      %v1847 = vld [vmem:[%s3 + $0x70] sm:$0xff]
      %v1848 = vld [vmem:[%s3 + $0x78] sm:$0xff]
      %v1849 = vld [vmem:[%s3 + $0x80] sm:$0xff]
      %v1850 = vld [vmem:[%s3 + $0x88] sm:$0xff]
      %v1851 = vld [vmem:[%s3 + $0x90] sm:$0xff]
      %v1852 = vld [vmem:[%s3 + $0x98] sm:$0xff]
      %v1853 = vld [vmem:[%s3 + $0xa0] sm:$0xff]
      %v1854 = vld [vmem:[%s3 + $0xa8] sm:$0xff]
      %v1855 = vld [vmem:[%s3 + $0xb0] sm:$0xff]
      %v1856 = vld [vmem:[%s3 + $0xb8] sm:$0xff]
      %v1857 = vld [vmem:[%s3 + $0xc0] sm:$0xff]
      %v1858 = vld [vmem:[%s3 + $0xc8] sm:$0xff]
      %v1859 = vld [vmem:[%s3 + $0xd0] sm:$0xff]
      %v1860 = vld [vmem:[%s3 + $0xd8] sm:$0xff]
      %v1861 = vld [vmem:[%s3 + $0xe0] sm:$0xff]
      %v1862 = vld [vmem:[%s3 + $0xe8] sm:$0xff]
      %v1863 = vld [vmem:[%s3 + $0xf0] sm:$0xff]
      %v1864 = vld [vmem:[%s3 + $0xf8] sm:$0xff]
      %v1865 = vld [vmem:[%s3 + $0x100] sm:$0xff]
      %v1866 = vld [vmem:[%s3 + $0x108] sm:$0xff]
      %v1867 = vld [vmem:[%s3 + $0x110] sm:$0xff]
      %v1868 = vld [vmem:[%s3 + $0x118] sm:$0xff]
      %v1869 = vld [vmem:[%s3 + $0x120] sm:$0xff]
      %v1870 = vld [vmem:[%s3 + $0x128] sm:$0xff]
      %v1871 = vld [vmem:[%s3 + $0x130] sm:$0xff]
      %v1872 = vld [vmem:[%s3 + $0x138] sm:$0xff]
      %v1873 = vld [vmem:[%s3 + $0x140] sm:$0xff]
      %v1874 = vld [vmem:[%s3 + $0x148] sm:$0xff]
      %v1875 = vld [vmem:[%s3 + $0x150] sm:$0xff]
      %v1876 = vld [vmem:[%s3 + $0x158] sm:$0xff]
      %v1877 = vld [vmem:[%s3 + $0x160] sm:$0xff]
      %v1878 = vld [vmem:[%s3 + $0x168] sm:$0xff]
      %v1879 = vld [vmem:[%s3 + $0x170] sm:$0xff]
      %v1880 = vld [vmem:[%s3 + $0x178] sm:$0xff]
      %1881 = vmatprep.subr.mxu0 %v1879
      %1882 = vmatpush1.msra.mxu0 %v1878
      %1883 = vmatprep.subr.mxu0 %v1876
      %1884 = vmatpush1.msra.mxu0 %v1875
      %1885 = vmatprep.subr.mxu0 %v1873
      %1886 = vmatpush1.msra.mxu0 %v1872
      %1887 = vmatprep.subr.mxu0 %v1870
      %1888 = vmatpush1.msra.mxu0 %v1869
      %1889 = vmatprep.subr.mxu0 %v1867
      %1890 = vmatpush1.msra.mxu0 %v1866
      %1891 = vmatprep.subr.mxu0 %v1864
      %1892 = vmatpush1.msra.mxu0 %v1863
      %1893 = vmatprep.subr.mxu0 %v1861
      %1894 = vmatpush1.msra.mxu0 %v1860
      %1895 = vmatprep.subr.mxu0 %v1858
      %1896 = vmatpush1.msra.mxu0 %v1857
      %1897 = vmatprep.subr.mxu0 %v1855
      %1898 = vmatpush1.msra.mxu0 %v1854
      %1899 = vmatprep.subr.mxu0 %v1852
      %1900 = vmatpush1.msra.mxu0 %v1851
      %1901 = vmatprep.subr.mxu0 %v1849
      %1902 = vmatpush1.msra.mxu0 %v1848
      %1903 = vmatprep.subr.mxu0 %v1846
      %1904 = vmatpush1.msra.mxu0 %v1845
      %1905 = vmatprep.subr.mxu0 %v1843
      %1906 = vmatpush1.msra.mxu0 %v1842
      %1907 = vmatprep.subr.mxu0 %v1840
      %1908 = vmatpush1.msra.mxu0 %v1839
      %1909 = vmatprep.subr.mxu0 %v1837
      %1910 = vmatpush1.msra.mxu0 %v1836
      %1911 = vmatprep.subr.mxu0 %v1834
      %1912 = vmatpush1.msra.mxu0 %v1833
      %1913 = vmatprep.subr.mxu0 0.0
      %1914 = vmatpush2.msra.mxu0 0.0
      %1915 = vmatprep.subr.mxu0 0.0
      %1916 = vmatpush2.msra.mxu0 0.0
      %1917 = vmatprep.subr.mxu0 0.0
      %1918 = vmatpush2.msra.mxu0 0.0
      %1919 = vmatprep.subr.mxu0 0.0
      %1920 = vmatpush2.msra.mxu0 0.0
      %1921 = vmatprep.subr.mxu0 0.0
      %1922 = vmatpush2.msra.mxu0 0.0
      %1923 = vmatprep.subr.mxu0 0.0
      %1924 = vmatpush2.msra.mxu0 0.0
      %1925 = vmatprep.subr.mxu0 0.0
      %1926 = vmatpush2.msra.mxu0 0.0
      %1927 = vmatprep.subr.mxu0 0.0
      %1928 = vmatpush2.msra.mxu0 0.0
      %1929 = vmatprep.subr.mxu0 0.0
      %1930 = vmatpush2.msra.mxu0 0.0
      %1931 = vmatprep.subr.mxu0 0.0
      %1932 = vmatpush2.msra.mxu0 0.0
      %1933 = vmatprep.subr.mxu0 0.0
      %1934 = vmatpush2.msra.mxu0 0.0
      %1935 = vmatprep.subr.mxu0 0.0
      %1936 = vmatpush2.msra.mxu0 0.0
      %1937 = vmatprep.subr.mxu0 0.0
      %1938 = vmatpush2.msra.mxu0 0.0
      %1939 = vmatprep.subr.mxu0 0.0
      %1940 = vmatpush2.msra.mxu0 0.0
      %1941 = vmatprep.subr.mxu0 0.0
      %1942 = vmatpush2.msra.mxu0 0.0
      %1943 = vmatprep.subr.mxu0 0.0
      %1944 = vmatpush2.msra.mxu0 0.0
      %1945 = vmatprep.mubr.f32.mxu0 0.0
      %1946 = vmatmul.mubr.f32.gmra.mxu0 %v1828
      %v1947 = vpop.f32.mrf.mxu0
      %v1948 = vadd.f32 0.0, %v1947
      %v1949 = vpop.f32.mrf.mxu0
      %v1950 = vadd.f32 0.0, %v1949
      %1951 = vdwg.mxu0
      %1952 = vmatprep.subr.mxu0 0.0
      %1953 = vmatpush1.msra.mxu0 %v1880
      %1954 = vmatprep.subr.mxu0 0.0
      %1955 = vmatpush1.msra.mxu0 %v1877
      %1956 = vmatprep.subr.mxu0 0.0
      %1957 = vmatpush1.msra.mxu0 %v1874
      %1958 = vmatprep.subr.mxu0 0.0
      %1959 = vmatpush1.msra.mxu0 %v1871
      %1960 = vmatprep.subr.mxu0 0.0
      %1961 = vmatpush1.msra.mxu0 %v1868
      %1962 = vmatprep.subr.mxu0 0.0
      %1963 = vmatpush1.msra.mxu0 %v1865
      %1964 = vmatprep.subr.mxu0 0.0
      %1965 = vmatpush1.msra.mxu0 %v1862
      %1966 = vmatprep.subr.mxu0 0.0
      %1967 = vmatpush1.msra.mxu0 %v1859
      %1968 = vmatprep.subr.mxu0 0.0
      %1969 = vmatpush1.msra.mxu0 %v1856
      %1970 = vmatprep.subr.mxu0 0.0
      %1971 = vmatpush1.msra.mxu0 %v1853
      %1972 = vmatprep.subr.mxu0 0.0
      %1973 = vmatpush1.msra.mxu0 %v1850
      %1974 = vmatprep.subr.mxu0 0.0
      %1975 = vmatpush1.msra.mxu0 %v1847
      %1976 = vmatprep.subr.mxu0 0.0
      %1977 = vmatpush1.msra.mxu0 %v1844
      %1978 = vmatprep.subr.mxu0 0.0
      %1979 = vmatpush1.msra.mxu0 %v1841
      %1980 = vmatprep.subr.mxu0 0.0
      %1981 = vmatpush1.msra.mxu0 %v1838
      %1982 = vmatprep.subr.mxu0 0.0
      %1983 = vmatpush1.msra.mxu0 %v1835
      %1984 = vmatprep.subr.mxu0 0.0
      %1985 = vmatpush2.msra.mxu0 0.0
      %1986 = vmatprep.subr.mxu0 0.0
      %1987 = vmatpush2.msra.mxu0 0.0
      %1988 = vmatprep.subr.mxu0 0.0
      %1989 = vmatpush2.msra.mxu0 0.0
      %1990 = vmatprep.subr.mxu0 0.0
      %1991 = vmatpush2.msra.mxu0 0.0
      %1992 = vmatprep.subr.mxu0 0.0
      %1993 = vmatpush2.msra.mxu0 0.0
      %1994 = vmatprep.subr.mxu0 0.0
      %1995 = vmatpush2.msra.mxu0 0.0
      %1996 = vmatprep.subr.mxu0 0.0
      %1997 = vmatpush2.msra.mxu0 0.0
      %1998 = vmatprep.subr.mxu0 0.0
      %1999 = vmatpush2.msra.mxu0 0.0
      %2000 = vmatprep.subr.mxu0 0.0
      %2001 = vmatpush2.msra.mxu0 0.0
      %2002 = vmatprep.subr.mxu0 0.0
      %2003 = vmatpush2.msra.mxu0 0.0
      %2004 = vmatprep.subr.mxu0 0.0
      %2005 = vmatpush2.msra.mxu0 0.0
      %2006 = vmatprep.subr.mxu0 0.0
      %2007 = vmatpush2.msra.mxu0 0.0
      %2008 = vmatprep.subr.mxu0 0.0
      %2009 = vmatpush2.msra.mxu0 0.0
      %2010 = vmatprep.subr.mxu0 0.0
      %2011 = vmatpush2.msra.mxu0 0.0
      %2012 = vmatprep.subr.mxu0 0.0
      %2013 = vmatpush2.msra.mxu0 0.0
      %2014 = vmatprep.subr.mxu0 0.0
      %2015 = vmatpush2.msra.mxu0 0.0
      %2016 = vmatprep.mubr.f32.mxu0 0.0
      %2017 = vmatmul.mubr.f32.gmra.mxu0 %v1828
      %v2018 = vpop.f32.mrf.mxu0
      %v2019 = vadd.f32 0.0, %v2018
      %v2020 = vpop.f32.mrf.mxu0
      %2021 = vdwg.mxu0
      %v2022 = vadd.f32 %v1830, %v1948
      %v2023 = vxor.u32 %v2022, 2147483648
      %v2024 = vmul.f32 %v2023, 1.442695
      %v2025 = vpow.pop %v2024
      %v2026 = vadd.f32 %v2025, 1.0
      %v2027 = vrcp.pop %v2026
      %v2028 = vmul.f32 1.0, %v2027
      %v2029 = vadd.f32 %v1831, %v1950
      %v2030 = vxor.u32 %v2029, 2147483648
      %v2031 = vmul.f32 %v2030, 1.442695
      %v2032 = vpow.pop %v2031
      %v2033 = vadd.f32 %v2032, 1.0
      %v2034 = vrcp.pop %v2033
      %v2035 = vmul.f32 1.0, %v2034
      %v2036 = vadd.f32 %v2019, %v289
      %v2037 = vmul.f32 %v2028, %v2036
      %v2038 = vadd.f32 %v1832, %v2037
      %v2039 = vtanh.pop %v2038
      %v2040 = vsub.f32 1.0, %v2035
      %v2041 = vmul.f32 %v2040, %v2039
      %v2042 = vmul.f32 %v2035, %v1828
      %v2043 = vadd.f32 %v2041, %v2042
      %s2044 = scalar_lea.vmem %s276, 56
      %2045 = vst [vmem:[%s2044] sm:$0xff] %v2043
      %s2046 = scalar_lea.vmem %s270, 56
      %v2047 = vld [vmem:[%s2046] sm:$0xff]
      %v2048 = vadd.f32 %v2043, %v2047
      %2049 = vst [vmem:[%s6] sm:$0xff] %v2048
      %s2050 = smul.u32 8, %s18
      %p2051 = scmp.lt.s32.totalorder %s2050, 15
      %s2052 = scalar_select %p2051, %s2050, 15
      %s2053 = smul.addr %s2052, 8
      %s2054 = scalar_lea.vmem %s5, %s2053
      // Predicated region
      $region45: #{noisy_gru_rollout.1} parent=39 // pred_check
        %p2055 = pneg %p151
      $region46: #{noisy_gru_rollout.1} parent=39 // pred_check_branch
        %2057 = sbr.rel (%p2055) target = $region48
      $region47: #{noisy_gru_rollout.1} parent=39 // pred_region
        %s2058 = smul.u32 8, %s18
      $region48: #{noisy_gru_rollout.1} parent=39 // pred_fallthru
        _
      // Predicated region
      $region49: #{noisy_gru_rollout.1} parent=39 // pred_check
        %p2059 = pneg %p172
      $region50: #{noisy_gru_rollout.1} parent=39 // pred_check_branch
        %2061 = sbr.rel (%p2059) target = $region52
      $region51: #{noisy_gru_rollout.1} parent=39 // pred_region
        _
      $region52: #{noisy_gru_rollout.1} parent=39 // pred_fallthru
        _
      // Predicated region
      $region53: #{noisy_gru_rollout.1} parent=39 // pred_check
        %p2062 = pneg %p172
      $region54: #{noisy_gru_rollout.1} parent=39 // pred_check_branch
        %2064 = sbr.rel (%p2062) target = $region56
      $region55: #{noisy_gru_rollout.1} parent=39 // pred_region
        _
      $region56: #{noisy_gru_rollout.1} parent=39 // pred_fallthru
        _
    $region40: #{noisy_gru_rollout.1} parent=5 // pred_fallthru
      _
    %p2065 = scmp.le.s32.totalorder 2, %s13
    // Predicated region
    $region57: #{noisy_gru_rollout.1} parent=5 // pred_check
      %p2066 = pneg %p2065
    $region58: #{noisy_gru_rollout.1} parent=5 // pred_check_branch
      %2068 = sbr.rel (%p2066) target = $region60
    $region59: #{noisy_gru_rollout.1} parent=5 // pred_region
      %s2069 = ssub.s32 %s13, 2
      // Predicated region
      $region61: #{noisy_gru_rollout.1} parent=59 // pred_check
        %p2070 = pneg %p157
      $region62: #{noisy_gru_rollout.1} parent=59 // pred_check_branch
        %2072 = sbr.rel (%p2070) target = $region64
      $region63: #{noisy_gru_rollout.1} parent=59 // pred_region
        %s2073 = smul.u32 8, %s19
        %p2074 = scmp.lt.s32.totalorder %s2073, 15
        %s2075 = scalar_select %p2074, %s2073, 15
        %s2076 = smul.addr %s2075, 8
        %s2077 = scalar_lea.vmem %s5, %s2076
      $region64: #{noisy_gru_rollout.1} parent=59 // pred_fallthru
        _
    $region60: #{noisy_gru_rollout.1} parent=5 // pred_fallthru
      _
  $region6: #{noisy_gru_rollout.1} parent=0 // loop_footer
    %s17 = sadd.s32 1, %s13
  $region7: #{noisy_gru_rollout.1} parent=0 // loop_footer_branch
    %12 = sbr.rel target = $region3
  $region8: #{noisy_gru_rollout.1} parent=0 // loop_exit
    _

</llo_original>
